<compile_context>
chip_gen: v7x
topology: tpu7x:2x2x1
jax: 0.10.0
libtpu: 0.0.40
codegen_flags: <defaults>
</compile_context>

<pallas_src>
import jax
import jax.numpy as jnp
from jax import lax
from jax.experimental import pallas as pl
from jax.experimental.pallas import tpu as pltpu

LAYER_DIMS = [28 * 28, 512, 256, 128, 64, 32, 1]
_INV_SQRT2 = 0.7071067811865476
_TINY_GRANULE = 16    # bf16 packs 16 rows per vreg; round tiny batches to this
_ROW_GRANULE = 128    # large-batch tiles use the MXU 128-row granule


def _gelu_exact_f32(v):
    # PyTorch nn.GELU() default: exact erf formulation, evaluated in f32.
    return 0.5 * v * (1.0 + lax.erf(v * _INV_SQRT2))


def _discriminator_kernel(x_ref,
                          w1, b1, w2, b2, w3, b3, w4, b4, w5, b5, w6, b6,
                          o_ref):
    def layer(h_bf16, w_ref, b_ref):
        # bf16 x bf16 -> f32 accumulation on the MXU; bias add in f32 (VPU).
        return jnp.dot(h_bf16, w_ref[...],
                       preferred_element_type=jnp.float32) + b_ref[...]

    # In-kernel cast: x arrives as f32 straight from HBM (no separate XLA cast
    # pass); the bf16 cast is one VPU op per element, hidden under layer-1 MXU.
    h = x_ref[...].astype(jnp.bfloat16)                       # (TB, 784)
    h = _gelu_exact_f32(layer(h, w1, b1)).astype(jnp.bfloat16)
    h = _gelu_exact_f32(layer(h, w2, b2)).astype(jnp.bfloat16)
    h = _gelu_exact_f32(layer(h, w3, b3)).astype(jnp.bfloat16)
    h = _gelu_exact_f32(layer(h, w4, b4)).astype(jnp.bfloat16)
    h = _gelu_exact_f32(layer(h, w5, b5)).astype(jnp.bfloat16)
    logits = layer(h, w6, b6)                                 # (TB, 1) f32
    # Sigmoid via tanh (single EUP op, no approximate reciprocal).
    o_ref[...] = (0.5 * (1.0 + jnp.tanh(0.5 * logits))).astype(o_ref.dtype)


def init_params(key):
    """Deterministic params mirroring nn.Linear shapes (stored as (in, out))."""
    params = []
    for i in range(len(LAYER_DIMS) - 1):
        fan_in, fan_out = LAYER_DIMS[i], LAYER_DIMS[i + 1]
        key, kw, kb = jax.random.split(key, 3)
        bound = 1.0 / jnp.sqrt(fan_in)
        w = jax.random.uniform(kw, (fan_in, fan_out), jnp.float32, -bound, bound)
        b = jax.random.uniform(kb, (1, fan_out), jnp.float32, -bound, bound)
        params.append((w, b))
    return params


def _pick_batch_tile(batch, tile_batch):
    """Batch tile: big enough to amortize per-step overhead, small enough to
    keep >= 2 grid steps for v7x megacore when the batch is large."""
    if batch <= 2 * _ROW_GRANULE:
        # Small batch: single tile rounded up to the 16-row bf16 granule.
        return max(_TINY_GRANULE, -(-batch // _TINY_GRANULE) * _TINY_GRANULE)
    # Large batch: biggest 128-row multiple <= tile_batch that still yields
    # >= 2 grid steps so both v7x TensorCores get batch tiles.
    half = (batch + 1) // 2
    tb = min(tile_batch, (half // _ROW_GRANULE) * _ROW_GRANULE)
    return max(_ROW_GRANULE, tb)


def discriminator_forward(x_nchw, params, *, tile_batch=512):
    """x_nchw: (B, 1, 28, 28) float32 -> (B, 1) float32 probabilities."""
    batch = x_nchw.shape[0]
    x_flat = x_nchw.reshape(batch, -1)              # (B, 784) f32; cast in-kernel

    tb = _pick_batch_tile(batch, tile_batch)
    padded = -(-batch // tb) * tb
    if padded != batch:
        x_flat = jnp.pad(x_flat, ((0, padded - batch), (0, 0)))
    n_tiles = padded // tb

    flat_params = []
    for w, b in params:
        flat_params.append(w.astype(jnp.bfloat16))  # matmul operands in bf16
        flat_params.append(b)                       # biases stay f32

    # x streams over the batch grid (double-buffered by the BlockSpec
    # pipeline); every weight/bias uses a constant index_map so it is fetched
    # once and stays resident in VMEM across all grid steps.
    in_specs = [pl.BlockSpec((tb, LAYER_DIMS[0]), lambda i: (i, 0))]
    for p in flat_params:
        in_specs.append(pl.BlockSpec(p.shape, lambda i: (0, 0)))

    out = pl.pallas_call(
        _discriminator_kernel,
        out_shape=jax.ShapeDtypeStruct((padded, 1), jnp.float32),
        grid=(n_tiles,),
        in_specs=in_specs,
        out_specs=pl.BlockSpec((tb, 1), lambda i: (i, 0)),
        compiler_params=pltpu.CompilerParams(
            dimension_semantics=("parallel",),   # megacore split on v7x
            vmem_limit_bytes=32 << 20,           # headroom on v7x's 64 MiB VMEM
        ),
    )(x_flat, *flat_params)
    return out[:batch]


def _reference_forward_f32(x_nchw, params):
    """Pure-f32 reference (original PyTorch semantics)."""
    h = x_nchw.reshape(x_nchw.shape[0], -1)
    for i, (w, b) in enumerate(params):
        h = h @ w + b
        if i < len(params) - 1:
            h = _gelu_exact_f32(h)
    return jax.nn.sigmoid(h)


def _reference_forward_bf16(x_nchw, params):
    """Reference mirroring the kernel's bf16-matmul / f32-epilogue numerics."""
    h = x_nchw.reshape(x_nchw.shape[0], -1).astype(jnp.bfloat16)
    for i, (w, b) in enumerate(params):
        y = jnp.dot(h, w.astype(jnp.bfloat16),
                    preferred_element_type=jnp.float32) + b
        if i < len(params) - 1:
            h = _gelu_exact_f32(y).astype(jnp.bfloat16)
        else:
            h = jax.nn.sigmoid(y)
    return h


if __name__ == "__main__":
    key = jax.random.PRNGKey(0)
    key_params, key_x = jax.random.split(key)
    params = init_params(key_params)

    # Small MNIST-like batch, NCHW (same layout torch expects).
    x = jax.random.normal(key_x, (8, 1, 28, 28), dtype=jnp.float32)

    out = jax.block_until_ready(discriminator_forward(x, params))
    assert out.shape == (8, 1), out.shape

    # Check vs. a reference with the same bf16-matmul numerics.
    ref_bf16 = _reference_forward_bf16(x, params)
    err_bf16 = float(jnp.max(jnp.abs(out - ref_bf16)))
    assert err_bf16 < 2e-2, err_bf16

    # Check vs. the exact-f32 PyTorch semantics.
    ref_f32 = _reference_forward_f32(x, params)
    err_f32 = float(jnp.max(jnp.abs(out - ref_f32)))
    assert err_f32 < 3e-2, err_f32

    print("KERNEL_OK")
</pallas_src>

<mosaic_0001>
module attributes {stable_mosaic.version = 11 : i64} {
  func.func @_discriminator_kernel(%arg0: i32, %arg1: memref<16x784xf32, #tpu.memory_space<vmem>>, %arg2: memref<784x512xbf16, #tpu.memory_space<vmem>>, %arg3: memref<1x512xf32, #tpu.memory_space<vmem>>, %arg4: memref<512x256xbf16, #tpu.memory_space<vmem>>, %arg5: memref<1x256xf32, #tpu.memory_space<vmem>>, %arg6: memref<256x128xbf16, #tpu.memory_space<vmem>>, %arg7: memref<1x128xf32, #tpu.memory_space<vmem>>, %arg8: memref<128x64xbf16, #tpu.memory_space<vmem>>, %arg9: memref<1x64xf32, #tpu.memory_space<vmem>>, %arg10: memref<64x32xbf16, #tpu.memory_space<vmem>>, %arg11: memref<1x32xf32, #tpu.memory_space<vmem>>, %arg12: memref<32x1xbf16, #tpu.memory_space<vmem>>, %arg13: memref<1x1xf32, #tpu.memory_space<vmem>>, %arg14: memref<16x1xf32, #tpu.memory_space<vmem>>) attributes {dimension_semantics = [#tpu.dimension_semantics<parallel>], iteration_bounds = array<i64: 1>, scalar_prefetch = 0 : i64, scratch_operands = 0 : i64, tpu.core_type = #tpu.core_type<tc>, window_params = [{transform_indices = @transform_0, window_bounds = array<i64: 16, 784>}, {pipeline_mode = #tpu.pipeline_mode<synchronous>, transform_indices = @transform_1, window_bounds = array<i64: 784, 512>}, {pipeline_mode = #tpu.pipeline_mode<synchronous>, transform_indices = @transform_2, window_bounds = array<i64: 1, 512>}, {pipeline_mode = #tpu.pipeline_mode<synchronous>, transform_indices = @transform_3, window_bounds = array<i64: 512, 256>}, {pipeline_mode = #tpu.pipeline_mode<synchronous>, transform_indices = @transform_4, window_bounds = array<i64: 1, 256>}, {pipeline_mode = #tpu.pipeline_mode<synchronous>, transform_indices = @transform_5, window_bounds = array<i64: 256, 128>}, {pipeline_mode = #tpu.pipeline_mode<synchronous>, transform_indices = @transform_6, window_bounds = array<i64: 1, 128>}, {pipeline_mode = #tpu.pipeline_mode<synchronous>, transform_indices = @transform_7, window_bounds = array<i64: 128, 64>}, {pipeline_mode = #tpu.pipeline_mode<synchronous>, transform_indices = @transform_8, window_bounds = array<i64: 1, 64>}, {pipeline_mode = #tpu.pipeline_mode<synchronous>, transform_indices = @transform_9, window_bounds = array<i64: 64, 32>}, {pipeline_mode = #tpu.pipeline_mode<synchronous>, transform_indices = @transform_10, window_bounds = array<i64: 1, 32>}, {pipeline_mode = #tpu.pipeline_mode<synchronous>, transform_indices = @transform_11, window_bounds = array<i64: 32, 1>}, {pipeline_mode = #tpu.pipeline_mode<synchronous>, transform_indices = @transform_12, window_bounds = array<i64: 1, 1>}, {transform_indices = @transform_13, window_bounds = array<i64: 16, 1>}]} {
    %c0 = arith.constant 0 : index
    %c0_0 = arith.constant 0 : index
    %0 = vector.load %arg1[%c0, %c0_0] : memref<16x784xf32, #tpu.memory_space<vmem>>, vector<16x784xf32>
    %1 = arith.truncf %0 : vector<16x784xf32> to vector<16x784xbf16>
    %c0_1 = arith.constant 0 : index
    %c0_2 = arith.constant 0 : index
    %2 = vector.load %arg2[%c0_1, %c0_2] : memref<784x512xbf16, #tpu.memory_space<vmem>>, vector<784x512xbf16>
    %cst = arith.constant dense<0.000000e+00> : vector<16x512xf32>
    %3 = tpu.matmul %1, %2, %cst {dimension_numbers = #tpu.dot_dimension_numbers<[1], [0], [0], [1], [0, 0, 1, 1], [], []>} : vector<16x784xbf16>, vector<784x512xbf16>, vector<16x512xf32> -> vector<16x512xf32>
    %c0_3 = arith.constant 0 : index
    %c0_4 = arith.constant 0 : index
    %4 = vector.load %arg3[%c0_3, %c0_4] : memref<1x512xf32, #tpu.memory_space<vmem>>, vector<1x512xf32>
    %5 = vector.broadcast %4 : vector<1x512xf32> to vector<16x512xf32>
    %6 = arith.addf %3, %5 : vector<16x512xf32>
    %cst_5 = arith.constant 5.000000e-01 : f32
    %7 = vector.broadcast %cst_5 : f32 to vector<16x512xf32>
    %8 = arith.mulf %7, %6 : vector<16x512xf32>
    %cst_6 = arith.constant 0.707106769 : f32
    %9 = vector.broadcast %cst_6 : f32 to vector<16x512xf32>
    %10 = arith.mulf %6, %9 : vector<16x512xf32>
    %11 = math.erf %10 : vector<16x512xf32>
    %cst_7 = arith.constant 1.000000e+00 : f32
    %12 = vector.broadcast %cst_7 : f32 to vector<16x512xf32>
    %13 = arith.addf %12, %11 : vector<16x512xf32>
    %14 = arith.mulf %8, %13 : vector<16x512xf32>
    %15 = arith.truncf %14 : vector<16x512xf32> to vector<16x512xbf16>
    %c0_8 = arith.constant 0 : index
    %c0_9 = arith.constant 0 : index
    %16 = vector.load %arg4[%c0_8, %c0_9] : memref<512x256xbf16, #tpu.memory_space<vmem>>, vector<512x256xbf16>
    %cst_10 = arith.constant dense<0.000000e+00> : vector<16x256xf32>
    %17 = tpu.matmul %15, %16, %cst_10 {dimension_numbers = #tpu.dot_dimension_numbers<[1], [0], [0], [1], [0, 0, 1, 1], [], []>} : vector<16x512xbf16>, vector<512x256xbf16>, vector<16x256xf32> -> vector<16x256xf32>
    %c0_11 = arith.constant 0 : index
    %c0_12 = arith.constant 0 : index
    %18 = vector.load %arg5[%c0_11, %c0_12] : memref<1x256xf32, #tpu.memory_space<vmem>>, vector<1x256xf32>
    %19 = vector.broadcast %18 : vector<1x256xf32> to vector<16x256xf32>
    %20 = arith.addf %17, %19 : vector<16x256xf32>
    %cst_13 = arith.constant 5.000000e-01 : f32
    %21 = vector.broadcast %cst_13 : f32 to vector<16x256xf32>
    %22 = arith.mulf %21, %20 : vector<16x256xf32>
    %cst_14 = arith.constant 0.707106769 : f32
    %23 = vector.broadcast %cst_14 : f32 to vector<16x256xf32>
    %24 = arith.mulf %20, %23 : vector<16x256xf32>
    %25 = math.erf %24 : vector<16x256xf32>
    %cst_15 = arith.constant 1.000000e+00 : f32
    %26 = vector.broadcast %cst_15 : f32 to vector<16x256xf32>
    %27 = arith.addf %26, %25 : vector<16x256xf32>
    %28 = arith.mulf %22, %27 : vector<16x256xf32>
    %29 = arith.truncf %28 : vector<16x256xf32> to vector<16x256xbf16>
    %c0_16 = arith.constant 0 : index
    %c0_17 = arith.constant 0 : index
    %30 = vector.load %arg6[%c0_16, %c0_17] : memref<256x128xbf16, #tpu.memory_space<vmem>>, vector<256x128xbf16>
    %cst_18 = arith.constant dense<0.000000e+00> : vector<16x128xf32>
    %31 = tpu.matmul %29, %30, %cst_18 {dimension_numbers = #tpu.dot_dimension_numbers<[1], [0], [0], [1], [0, 0, 1, 1], [], []>} : vector<16x256xbf16>, vector<256x128xbf16>, vector<16x128xf32> -> vector<16x128xf32>
    %c0_19 = arith.constant 0 : index
    %c0_20 = arith.constant 0 : index
    %32 = vector.load %arg7[%c0_19, %c0_20] : memref<1x128xf32, #tpu.memory_space<vmem>>, vector<1x128xf32>
    %33 = vector.broadcast %32 : vector<1x128xf32> to vector<16x128xf32>
    %34 = arith.addf %31, %33 : vector<16x128xf32>
    %cst_21 = arith.constant 5.000000e-01 : f32
    %35 = vector.broadcast %cst_21 : f32 to vector<16x128xf32>
    %36 = arith.mulf %35, %34 : vector<16x128xf32>
    %cst_22 = arith.constant 0.707106769 : f32
    %37 = vector.broadcast %cst_22 : f32 to vector<16x128xf32>
    %38 = arith.mulf %34, %37 : vector<16x128xf32>
    %39 = math.erf %38 : vector<16x128xf32>
    %cst_23 = arith.constant 1.000000e+00 : f32
    %40 = vector.broadcast %cst_23 : f32 to vector<16x128xf32>
    %41 = arith.addf %40, %39 : vector<16x128xf32>
    %42 = arith.mulf %36, %41 : vector<16x128xf32>
    %43 = arith.truncf %42 : vector<16x128xf32> to vector<16x128xbf16>
    %c0_24 = arith.constant 0 : index
    %c0_25 = arith.constant 0 : index
    %44 = vector.load %arg8[%c0_24, %c0_25] : memref<128x64xbf16, #tpu.memory_space<vmem>>, vector<128x64xbf16>
    %cst_26 = arith.constant dense<0.000000e+00> : vector<16x64xf32>
    %45 = tpu.matmul %43, %44, %cst_26 {dimension_numbers = #tpu.dot_dimension_numbers<[1], [0], [0], [1], [0, 0, 1, 1], [], []>} : vector<16x128xbf16>, vector<128x64xbf16>, vector<16x64xf32> -> vector<16x64xf32>
    %c0_27 = arith.constant 0 : index
    %c0_28 = arith.constant 0 : index
    %46 = vector.load %arg9[%c0_27, %c0_28] : memref<1x64xf32, #tpu.memory_space<vmem>>, vector<1x64xf32>
    %47 = vector.broadcast %46 : vector<1x64xf32> to vector<16x64xf32>
    %48 = arith.addf %45, %47 : vector<16x64xf32>
    %cst_29 = arith.constant 5.000000e-01 : f32
    %49 = vector.broadcast %cst_29 : f32 to vector<16x64xf32>
    %50 = arith.mulf %49, %48 : vector<16x64xf32>
    %cst_30 = arith.constant 0.707106769 : f32
    %51 = vector.broadcast %cst_30 : f32 to vector<16x64xf32>
    %52 = arith.mulf %48, %51 : vector<16x64xf32>
    %53 = math.erf %52 : vector<16x64xf32>
    %cst_31 = arith.constant 1.000000e+00 : f32
    %54 = vector.broadcast %cst_31 : f32 to vector<16x64xf32>
    %55 = arith.addf %54, %53 : vector<16x64xf32>
    %56 = arith.mulf %50, %55 : vector<16x64xf32>
    %57 = arith.truncf %56 : vector<16x64xf32> to vector<16x64xbf16>
    %c0_32 = arith.constant 0 : index
    %c0_33 = arith.constant 0 : index
    %58 = vector.load %arg10[%c0_32, %c0_33] : memref<64x32xbf16, #tpu.memory_space<vmem>>, vector<64x32xbf16>
    %cst_34 = arith.constant dense<0.000000e+00> : vector<16x32xf32>
    %59 = tpu.matmul %57, %58, %cst_34 {dimension_numbers = #tpu.dot_dimension_numbers<[1], [0], [0], [1], [0, 0, 1, 1], [], []>} : vector<16x64xbf16>, vector<64x32xbf16>, vector<16x32xf32> -> vector<16x32xf32>
    %c0_35 = arith.constant 0 : index
    %c0_36 = arith.constant 0 : index
    %60 = vector.load %arg11[%c0_35, %c0_36] : memref<1x32xf32, #tpu.memory_space<vmem>>, vector<1x32xf32>
    %61 = vector.broadcast %60 : vector<1x32xf32> to vector<16x32xf32>
    %62 = arith.addf %59, %61 : vector<16x32xf32>
    %cst_37 = arith.constant 5.000000e-01 : f32
    %63 = vector.broadcast %cst_37 : f32 to vector<16x32xf32>
    %64 = arith.mulf %63, %62 : vector<16x32xf32>
    %cst_38 = arith.constant 0.707106769 : f32
    %65 = vector.broadcast %cst_38 : f32 to vector<16x32xf32>
    %66 = arith.mulf %62, %65 : vector<16x32xf32>
    %67 = math.erf %66 : vector<16x32xf32>
    %cst_39 = arith.constant 1.000000e+00 : f32
    %68 = vector.broadcast %cst_39 : f32 to vector<16x32xf32>
    %69 = arith.addf %68, %67 : vector<16x32xf32>
    %70 = arith.mulf %64, %69 : vector<16x32xf32>
    %71 = arith.truncf %70 : vector<16x32xf32> to vector<16x32xbf16>
    %c0_40 = arith.constant 0 : index
    %c0_41 = arith.constant 0 : index
    %72 = vector.load %arg12[%c0_40, %c0_41] : memref<32x1xbf16, #tpu.memory_space<vmem>>, vector<32x1xbf16>
    %cst_42 = arith.constant dense<0.000000e+00> : vector<16x1xf32>
    %73 = tpu.matmul %71, %72, %cst_42 {dimension_numbers = #tpu.dot_dimension_numbers<[1], [0], [0], [1], [0, 0, 1, 1], [], []>} : vector<16x32xbf16>, vector<32x1xbf16>, vector<16x1xf32> -> vector<16x1xf32>
    %c0_43 = arith.constant 0 : index
    %c0_44 = arith.constant 0 : index
    %74 = vector.load %arg13[%c0_43, %c0_44] : memref<1x1xf32, #tpu.memory_space<vmem>>, vector<1x1xf32>
    %75 = vector.broadcast %74 : vector<1x1xf32> to vector<16x1xf32>
    %76 = arith.addf %73, %75 : vector<16x1xf32>
    %cst_45 = arith.constant 5.000000e-01 : f32
    %77 = vector.broadcast %cst_45 : f32 to vector<16x1xf32>
    %78 = arith.mulf %77, %76 : vector<16x1xf32>
    %79 = math.tanh %78 : vector<16x1xf32>
    %cst_46 = arith.constant 1.000000e+00 : f32
    %80 = vector.broadcast %cst_46 : f32 to vector<16x1xf32>
    %81 = arith.addf %80, %79 : vector<16x1xf32>
    %cst_47 = arith.constant 5.000000e-01 : f32
    %82 = vector.broadcast %cst_47 : f32 to vector<16x1xf32>
    %83 = arith.mulf %82, %81 : vector<16x1xf32>
    %c0_48 = arith.constant 0 : index
    %c0_49 = arith.constant 0 : index
    %84 = vector.load %arg14[%c0_48, %c0_49] : memref<16x1xf32, #tpu.memory_space<vmem>>, vector<16x1xf32>
    tpu.vector_store %arg14[%c0_48, %c0_49], %83 {strides = array<i32>} : memref<16x1xf32, #tpu.memory_space<vmem>>, vector<16x1xf32>,
    return
  }
  func.func @transform_0(%arg0: i32) -> (i32, i32) {
    %c0_i32 = arith.constant 0 : i32
    %c0_i32_0 = arith.constant 0 : i32
    return %arg0, %c0_i32 : i32, i32
  }
  func.func @transform_1(%arg0: i32) -> (i32, i32) {
    %c0_i32 = arith.constant 0 : i32
    %c0_i32_0 = arith.constant 0 : i32
    %c0_i32_1 = arith.constant 0 : i32
    return %c0_i32, %c0_i32_0 : i32, i32
  }
  func.func @transform_2(%arg0: i32) -> (i32, i32) {
    %c0_i32 = arith.constant 0 : i32
    %c0_i32_0 = arith.constant 0 : i32
    %c0_i32_1 = arith.constant 0 : i32
    return %c0_i32, %c0_i32_0 : i32, i32
  }
  func.func @transform_3(%arg0: i32) -> (i32, i32) {
    %c0_i32 = arith.constant 0 : i32
    %c0_i32_0 = arith.constant 0 : i32
    %c0_i32_1 = arith.constant 0 : i32
    return %c0_i32, %c0_i32_0 : i32, i32
  }
  func.func @transform_4(%arg0: i32) -> (i32, i32) {
    %c0_i32 = arith.constant 0 : i32
    %c0_i32_0 = arith.constant 0 : i32
    %c0_i32_1 = arith.constant 0 : i32
    return %c0_i32, %c0_i32_0 : i32, i32
  }
  func.func @transform_5(%arg0: i32) -> (i32, i32) {
    %c0_i32 = arith.constant 0 : i32
    %c0_i32_0 = arith.constant 0 : i32
    %c0_i32_1 = arith.constant 0 : i32
    return %c0_i32, %c0_i32_0 : i32, i32
  }
  func.func @transform_6(%arg0: i32) -> (i32, i32) {
    %c0_i32 = arith.constant 0 : i32
    %c0_i32_0 = arith.constant 0 : i32
    %c0_i32_1 = arith.constant 0 : i32
    return %c0_i32, %c0_i32_0 : i32, i32
  }
  func.func @transform_7(%arg0: i32) -> (i32, i32) {
    %c0_i32 = arith.constant 0 : i32
    %c0_i32_0 = arith.constant 0 : i32
    %c0_i32_1 = arith.constant 0 : i32
    return %c0_i32, %c0_i32_0 : i32, i32
  }
  func.func @transform_8(%arg0: i32) -> (i32, i32) {
    %c0_i32 = arith.constant 0 : i32
    %c0_i32_0 = arith.constant 0 : i32
    %c0_i32_1 = arith.constant 0 : i32
    return %c0_i32, %c0_i32_0 : i32, i32
  }
  func.func @transform_9(%arg0: i32) -> (i32, i32) {
    %c0_i32 = arith.constant 0 : i32
    %c0_i32_0 = arith.constant 0 : i32
    %c0_i32_1 = arith.constant 0 : i32
    return %c0_i32, %c0_i32_0 : i32, i32
  }
  func.func @transform_10(%arg0: i32) -> (i32, i32) {
    %c0_i32 = arith.constant 0 : i32
    %c0_i32_0 = arith.constant 0 : i32
    %c0_i32_1 = arith.constant 0 : i32
    return %c0_i32, %c0_i32_0 : i32, i32
  }
  func.func @transform_11(%arg0: i32) -> (i32, i32) {
    %c0_i32 = arith.constant 0 : i32
    %c0_i32_0 = arith.constant 0 : i32
    %c0_i32_1 = arith.constant 0 : i32
    return %c0_i32, %c0_i32_0 : i32, i32
  }
  func.func @transform_12(%arg0: i32) -> (i32, i32) {
    %c0_i32 = arith.constant 0 : i32
    %c0_i32_0 = arith.constant 0 : i32
    %c0_i32_1 = arith.constant 0 : i32
    return %c0_i32, %c0_i32_0 : i32, i32
  }
  func.func @transform_13(%arg0: i32) -> (i32, i32) {
    %c0_i32 = arith.constant 0 : i32
    %c0_i32_0 = arith.constant 0 : i32
    return %arg0, %c0_i32 : i32, i32
  }
}

</mosaic_0001>

<llo_original>
// kernel: tpu_custom_call.1
$region0: #{tpu_custom_call.1}
  #allocation0 [shape = 'u32[]', space=smem, size = 0x4, offset = 0x4, fixed_abs, tag = 'smem constant byte address 0x4 - core index']
  #allocation1 [shape = 'u32[144,128]{1,0:T(1,128)}', space=vmem, size = 0x12000, scoped, tag = 'internal scratch']
  #allocation2 [shape = 'f32[1,1]{1,0:T(1,128)S(1)}', space=vmem, size = 0x200, scoped, tag = 'scoped memory for tpu_custom_call.1']
  %s0 = inlined_call_operand.hbm [shape: f32[16,784], index: 0, kind: input, shape index: {}]
  %s1 = inlined_call_operand.hbm [shape: bf16[784,512], index: 1, kind: input, shape index: {}]
  %s2 = inlined_call_operand.vmem [shape: f32[1,512], index: 2, kind: input, shape index: {}]
  %s3 = inlined_call_operand.hbm [shape: bf16[512,256], index: 3, kind: input, shape index: {}]
  %s4 = inlined_call_operand.vmem [shape: f32[1,256], index: 4, kind: input, shape index: {}]
  %s5 = inlined_call_operand.vmem [shape: bf16[256,128], index: 5, kind: input, shape index: {}]
  %s6 = inlined_call_operand.vmem [shape: f32[1,128], index: 6, kind: input, shape index: {}]
  %s7 = inlined_call_operand.vmem [shape: bf16[128,64], index: 7, kind: input, shape index: {}]
  %s8 = inlined_call_operand.vmem [shape: f32[1,64], index: 8, kind: input, shape index: {}]
  %s9 = inlined_call_operand.vmem [shape: bf16[64,32], index: 9, kind: input, shape index: {}]
  %s10 = inlined_call_operand.vmem [shape: f32[1,32], index: 10, kind: input, shape index: {}]
  %s11 = inlined_call_operand.vmem [shape: bf16[32,1], index: 11, kind: input, shape index: {}]
  %s12 = inlined_call_operand.<no memory space> [shape: f32[1,1], index: 12, kind: input, shape index: {}]
  %s13 = inlined_call_operand.vmem [shape: f32[16,1], index: 13, kind: output, shape index: {}]
  %s14 = sld [smem:[#allocation0]]
  $region74: #{tpu_custom_call.1} parent=0
    _
  %s16 = ssub.s32 1, %s14
  %s17 = scalar_select 0, %s16, %s14
  %v18 = vstv %s12
  %19 = vst [vmem:[#allocation2] sm:$0x1] %v18
  $region1: #{tpu_custom_call.1} parent=0
    #allocation3 [shape = 'u8[57344]{0}', space=vmem, size = 0xe000, scoped, tag = 'input window, operand 0, single buffered']
    #allocation4 [shape = 's32[1]{0}', space=sflag, size = 0x4, scoped, tag = 'scoped memory for tpu_custom_call.1']
    #allocation5 [shape = 'u8[802816]{0}', space=vmem, size = 0xc4000, scoped, tag = 'input window, operand 1, single buffered']
    #allocation6 [shape = 's32[1]{0}', space=sflag, size = 0x4, scoped, tag = 'scoped memory for tpu_custom_call.1']
    #allocation7 [shape = 'u8[262144]{0}', space=vmem, size = 0x40000, scoped, tag = 'input window, operand 3, single buffered']
    %20 = vsyncpa [#allocation4], 0
    %21 = vsyncpa [#allocation6], 0
    // Predicated region
    $region2: #{tpu_custom_call.1} parent=1 // pred_check
      _
    $region3: #{tpu_custom_call.1} parent=1 // pred_check_branch
      %23 = sbr.rel (0) target = $region5
    $region4: #{tpu_custom_call.1} parent=1 // pred_region
      %s25 = ssub.s32 1792, 1792
      %26 = vsyncadd [#allocation4], %s25
      %s27 = sshll.u32 [#allocation3], 4
      %s28 = int_to_ptr.vmem [resolvable:$true] %s27
      %33 = dma.hbm_to_vmem [thread:$0]  %s0, 1792, %s28, [#allocation4], 896, 896, 56
    $region5: #{tpu_custom_call.1} parent=1 // pred_fallthru
      _
    // Predicated region
    $region6: #{tpu_custom_call.1} parent=1 // pred_check
      _
    $region7: #{tpu_custom_call.1} parent=1 // pred_check_branch
      %35 = sbr.rel (0) target = $region9
    $region8: #{tpu_custom_call.1} parent=1 // pred_region
      %s37 = ssub.s32 25088, 25088
      %38 = vsyncadd [#allocation6], %s37
      %s39 = sshll.u32 [#allocation5], 4
      %s40 = int_to_ptr.vmem [resolvable:$true] %s39
      %45 = dma.hbm_to_vmem [thread:$0]  %s1, 25088, %s40, [#allocation6], 256, 256, 16
    $region9: #{tpu_custom_call.1} parent=1 // pred_fallthru
      _
    // Predicated region
    $region10: #{tpu_custom_call.1} parent=1 // pred_check
      _
    $region11: #{tpu_custom_call.1} parent=1 // pred_check_branch
      %47 = sbr.rel (0) target = $region13
    $region12: #{tpu_custom_call.1} parent=1 // pred_region
      _
    $region13: #{tpu_custom_call.1} parent=1 // pred_fallthru
      _
    // Predicated region
    $region14: #{tpu_custom_call.1} parent=1 // pred_check
      _
    $region15: #{tpu_custom_call.1} parent=1 // pred_check_branch
      %49 = sbr.rel (0) target = $region17
    $region16: #{tpu_custom_call.1} parent=1 // pred_region
      %s51 = ssub.s32 8192, 8192
      %52 = vsyncadd [#allocation6], %s51
      %s53 = sshll.u32 [#allocation7], 4
      %s54 = int_to_ptr.vmem [resolvable:$true] %s53
      %59 = dma.hbm_to_vmem [thread:$0]  %s3, 8192, %s54, [#allocation6], 128, 128, 8
    $region17: #{tpu_custom_call.1} parent=1 // pred_fallthru
      _
    // Predicated region
    $region18: #{tpu_custom_call.1} parent=1 // pred_check
      _
    $region19: #{tpu_custom_call.1} parent=1 // pred_check_branch
      %61 = sbr.rel (0) target = $region21
    $region20: #{tpu_custom_call.1} parent=1 // pred_region
      _
    $region21: #{tpu_custom_call.1} parent=1 // pred_fallthru
      _
    // Predicated region
    $region22: #{tpu_custom_call.1} parent=1 // pred_check
      _
    $region23: #{tpu_custom_call.1} parent=1 // pred_check_branch
      %63 = sbr.rel (0) target = $region25
    $region24: #{tpu_custom_call.1} parent=1 // pred_region
      _
    $region25: #{tpu_custom_call.1} parent=1 // pred_fallthru
      _
    // Predicated region
    $region26: #{tpu_custom_call.1} parent=1 // pred_check
      _
    $region27: #{tpu_custom_call.1} parent=1 // pred_check_branch
      %65 = sbr.rel (0) target = $region29
    $region28: #{tpu_custom_call.1} parent=1 // pred_region
      _
    $region29: #{tpu_custom_call.1} parent=1 // pred_fallthru
      _
    // Predicated region
    $region30: #{tpu_custom_call.1} parent=1 // pred_check
      _
    $region31: #{tpu_custom_call.1} parent=1 // pred_check_branch
      %67 = sbr.rel (0) target = $region33
    $region32: #{tpu_custom_call.1} parent=1 // pred_region
      _
    $region33: #{tpu_custom_call.1} parent=1 // pred_fallthru
      _
    // Predicated region
    $region34: #{tpu_custom_call.1} parent=1 // pred_check
      _
    $region35: #{tpu_custom_call.1} parent=1 // pred_check_branch
      %69 = sbr.rel (0) target = $region37
    $region36: #{tpu_custom_call.1} parent=1 // pred_region
      _
    $region37: #{tpu_custom_call.1} parent=1 // pred_fallthru
      _
    // Predicated region
    $region38: #{tpu_custom_call.1} parent=1 // pred_check
      _
    $region39: #{tpu_custom_call.1} parent=1 // pred_check_branch
      %71 = sbr.rel (0) target = $region41
    $region40: #{tpu_custom_call.1} parent=1 // pred_region
      _
    $region41: #{tpu_custom_call.1} parent=1 // pred_fallthru
      _
    // Predicated region
    $region42: #{tpu_custom_call.1} parent=1 // pred_check
      _
    $region43: #{tpu_custom_call.1} parent=1 // pred_check_branch
      %73 = sbr.rel (0) target = $region45
    $region44: #{tpu_custom_call.1} parent=1 // pred_region
      _
    $region45: #{tpu_custom_call.1} parent=1 // pred_fallthru
      _
    // Predicated region
    $region46: #{tpu_custom_call.1} parent=1 // pred_check
      _
    $region47: #{tpu_custom_call.1} parent=1 // pred_check_branch
      %75 = sbr.rel (0) target = $region49
    $region48: #{tpu_custom_call.1} parent=1 // pred_region
      _
    $region49: #{tpu_custom_call.1} parent=1 // pred_fallthru
      _
    // Predicated region
    $region50: #{tpu_custom_call.1} parent=1 // pred_check
      _
    $region51: #{tpu_custom_call.1} parent=1 // pred_check_branch
      %77 = sbr.rel (0) target = $region53
    $region52: #{tpu_custom_call.1} parent=1 // pred_region
      _
    $region53: #{tpu_custom_call.1} parent=1 // pred_fallthru
      _
    // Predicated region
    $region54: #{tpu_custom_call.1} parent=1 // pred_check
      _
    $region55: #{tpu_custom_call.1} parent=1 // pred_check_branch
      %79 = sbr.rel (0) target = $region57
    $region56: #{tpu_custom_call.1} parent=1 // pred_region
      %80 = dma.done [#allocation4], 1792
    $region57: #{tpu_custom_call.1} parent=1 // pred_fallthru
      _
    // Predicated region
    $region58: #{tpu_custom_call.1} parent=1 // pred_check
      _
    $region59: #{tpu_custom_call.1} parent=1 // pred_check_branch
      %82 = sbr.rel (0) target = $region61
    $region60: #{tpu_custom_call.1} parent=1 // pred_region
      %83 = dma.done [#allocation6], 25088
    $region61: #{tpu_custom_call.1} parent=1 // pred_fallthru
      _
    // Predicated region
    $region62: #{tpu_custom_call.1} parent=1 // pred_check
      _
    $region63: #{tpu_custom_call.1} parent=1 // pred_check_branch
      %85 = sbr.rel (0) target = $region65
    $region64: #{tpu_custom_call.1} parent=1 // pred_region
      %86 = dma.done [#allocation6], 8192
    $region65: #{tpu_custom_call.1} parent=1 // pred_fallthru
      _
    %v88 = vld [vmem:[#allocation3] sm:$0xff]
    %v89 = vld [vmem:[#allocation3 + $0x8] sm:$0xff]
    %v90 = vld [vmem:[#allocation3 + $0x10] sm:$0xff]
    %v91 = vld [vmem:[#allocation3 + $0x18] sm:$0xff]
    %v92 = vld [vmem:[#allocation3 + $0x20] sm:$0xff]
    %v93 = vld [vmem:[#allocation3 + $0x28] sm:$0xff]
    %v94 = vld [vmem:[#allocation3 + $0x30] sm:$0xff]
    %v95 = vld [vmem:[#allocation3 + $0x38] sm:$0xff]
    %v96 = vld [vmem:[#allocation3 + $0x40] sm:$0xff]
    %v97 = vld [vmem:[#allocation3 + $0x48] sm:$0xff]
    %v98 = vld [vmem:[#allocation3 + $0x50] sm:$0xff]
    %v99 = vld [vmem:[#allocation3 + $0x58] sm:$0xff]
    %v100 = vld [vmem:[#allocation3 + $0x60] sm:$0xff]
    %v101 = vld [vmem:[#allocation3 + $0x68] sm:$0xff]
    %v102 = vpack.c.bf16 %v95, %v88
    %v103 = vpack.c.bf16 %v96, %v89
    %v104 = vpack.c.bf16 %v97, %v90
    %v105 = vpack.c.bf16 %v98, %v91
    %v106 = vpack.c.bf16 %v99, %v92
    %v107 = vpack.c.bf16 %v100, %v93
    %v108 = vpack.c.bf16 %v101, %v94
    %v109 = vld [vmem:[#allocation5] sm:$0xff]
    %v110 = vld [vmem:[#allocation5 + $0x8] sm:$0xff]
    %v111 = vld [vmem:[#allocation5 + $0x10] sm:$0xff]
    %v112 = vld [vmem:[#allocation5 + $0x18] sm:$0xff]
    %v113 = vld [vmem:[#allocation5 + $0x20] sm:$0xff]
    %v114 = vld [vmem:[#allocation5 + $0x28] sm:$0xff]
    %v115 = vld [vmem:[#allocation5 + $0x30] sm:$0xff]
    %v116 = vld [vmem:[#allocation5 + $0x38] sm:$0xff]
    %v117 = vld [vmem:[#allocation5 + $0x40] sm:$0xff]
    %v118 = vld [vmem:[#allocation5 + $0x48] sm:$0xff]
    %v119 = vld [vmem:[#allocation5 + $0x50] sm:$0xff]
    %v120 = vld [vmem:[#allocation5 + $0x58] sm:$0xff]
    %v121 = vld [vmem:[#allocation5 + $0x60] sm:$0xff]
    %v122 = vld [vmem:[#allocation5 + $0x68] sm:$0xff]
    %v123 = vld [vmem:[#allocation5 + $0x70] sm:$0xff]
    %v124 = vld [vmem:[#allocation5 + $0x78] sm:$0xff]
    %v125 = vld [vmem:[#allocation5 + $0x80] sm:$0xff]
    %v126 = vld [vmem:[#allocation5 + $0x88] sm:$0xff]
    %v127 = vld [vmem:[#allocation5 + $0x90] sm:$0xff]
    %v128 = vld [vmem:[#allocation5 + $0x98] sm:$0xff]
    %v129 = vld [vmem:[#allocation5 + $0xa0] sm:$0xff]
    %v130 = vld [vmem:[#allocation5 + $0xa8] sm:$0xff]
    %v131 = vld [vmem:[#allocation5 + $0xb0] sm:$0xff]
    %v132 = vld [vmem:[#allocation5 + $0xb8] sm:$0xff]
    %v133 = vld [vmem:[#allocation5 + $0xc0] sm:$0xff]
    %v134 = vld [vmem:[#allocation5 + $0xc8] sm:$0xff]
    %v135 = vld [vmem:[#allocation5 + $0xd0] sm:$0xff]
    %v136 = vld [vmem:[#allocation5 + $0xd8] sm:$0xff]
    %v137 = vld [vmem:[#allocation5 + $0xe0] sm:$0xff]
    %v138 = vld [vmem:[#allocation5 + $0xe8] sm:$0xff]
    %v139 = vld [vmem:[#allocation5 + $0xf0] sm:$0xff]
    %v140 = vld [vmem:[#allocation5 + $0xf8] sm:$0xff]
    %v141 = vld [vmem:[#allocation5 + $0x100] sm:$0xff]
    %v142 = vld [vmem:[#allocation5 + $0x108] sm:$0xff]
    %v143 = vld [vmem:[#allocation5 + $0x110] sm:$0xff]
    %v144 = vld [vmem:[#allocation5 + $0x118] sm:$0xff]
    %v145 = vld [vmem:[#allocation5 + $0x120] sm:$0xff]
    %v146 = vld [vmem:[#allocation5 + $0x128] sm:$0xff]
    %v147 = vld [vmem:[#allocation5 + $0x130] sm:$0xff]
    %v148 = vld [vmem:[#allocation5 + $0x138] sm:$0xff]
    %v149 = vld [vmem:[#allocation5 + $0x140] sm:$0xff]
    %v150 = vld [vmem:[#allocation5 + $0x148] sm:$0xff]
    %v151 = vld [vmem:[#allocation5 + $0x150] sm:$0xff]
    %v152 = vld [vmem:[#allocation5 + $0x158] sm:$0xff]
    %v153 = vld [vmem:[#allocation5 + $0x160] sm:$0xff]
    %v154 = vld [vmem:[#allocation5 + $0x168] sm:$0xff]
    %v155 = vld [vmem:[#allocation5 + $0x170] sm:$0xff]
    %v156 = vld [vmem:[#allocation5 + $0x178] sm:$0xff]
    %v157 = vld [vmem:[#allocation5 + $0x180] sm:$0xff]
    %v158 = vld [vmem:[#allocation5 + $0x188] sm:$0xff]
    %v159 = vld [vmem:[#allocation5 + $0x190] sm:$0xff]
    %v160 = vld [vmem:[#allocation5 + $0x198] sm:$0xff]
    %v161 = vld [vmem:[#allocation5 + $0x1a0] sm:$0xff]
    %v162 = vld [vmem:[#allocation5 + $0x1a8] sm:$0xff]
    %v163 = vld [vmem:[#allocation5 + $0x1b0] sm:$0xff]
    %v164 = vld [vmem:[#allocation5 + $0x1b8] sm:$0xff]
    %v165 = vld [vmem:[#allocation5 + $0x1c0] sm:$0xff]
    %v166 = vld [vmem:[#allocation5 + $0x1c8] sm:$0xff]
    %v167 = vld [vmem:[#allocation5 + $0x1d0] sm:$0xff]
    %v168 = vld [vmem:[#allocation5 + $0x1d8] sm:$0xff]
    %v169 = vld [vmem:[#allocation5 + $0x1e0] sm:$0xff]
    %v170 = vld [vmem:[#allocation5 + $0x1e8] sm:$0xff]
    %v171 = vld [vmem:[#allocation5 + $0x1f0] sm:$0xff]
    %v172 = vld [vmem:[#allocation5 + $0x1f8] sm:$0xff]
    %v173 = vld [vmem:[#allocation5 + $0x200] sm:$0xff]
    %v174 = vld [vmem:[#allocation5 + $0x208] sm:$0xff]
    %v175 = vld [vmem:[#allocation5 + $0x210] sm:$0xff]
    %v176 = vld [vmem:[#allocation5 + $0x218] sm:$0xff]
    %v177 = vld [vmem:[#allocation5 + $0x220] sm:$0xff]
    %v178 = vld [vmem:[#allocation5 + $0x228] sm:$0xff]
    %v179 = vld [vmem:[#allocation5 + $0x230] sm:$0xff]
    %v180 = vld [vmem:[#allocation5 + $0x238] sm:$0xff]
    %v181 = vld [vmem:[#allocation5 + $0x240] sm:$0xff]
    %v182 = vld [vmem:[#allocation5 + $0x248] sm:$0xff]
    %v183 = vld [vmem:[#allocation5 + $0x250] sm:$0xff]
    %v184 = vld [vmem:[#allocation5 + $0x258] sm:$0xff]
    %v185 = vld [vmem:[#allocation5 + $0x260] sm:$0xff]
    %v186 = vld [vmem:[#allocation5 + $0x268] sm:$0xff]
    %v187 = vld [vmem:[#allocation5 + $0x270] sm:$0xff]
    %v188 = vld [vmem:[#allocation5 + $0x278] sm:$0xff]
    %v189 = vld [vmem:[#allocation5 + $0x280] sm:$0xff]
    %v190 = vld [vmem:[#allocation5 + $0x288] sm:$0xff]
    %v191 = vld [vmem:[#allocation5 + $0x290] sm:$0xff]
    %v192 = vld [vmem:[#allocation5 + $0x298] sm:$0xff]
    %v193 = vld [vmem:[#allocation5 + $0x2a0] sm:$0xff]
    %v194 = vld [vmem:[#allocation5 + $0x2a8] sm:$0xff]
    %v195 = vld [vmem:[#allocation5 + $0x2b0] sm:$0xff]
    %v196 = vld [vmem:[#allocation5 + $0x2b8] sm:$0xff]
    %v197 = vld [vmem:[#allocation5 + $0x2c0] sm:$0xff]
    %v198 = vld [vmem:[#allocation5 + $0x2c8] sm:$0xff]
    %v199 = vld [vmem:[#allocation5 + $0x2d0] sm:$0xff]
    %v200 = vld [vmem:[#allocation5 + $0x2d8] sm:$0xff]
    %v201 = vld [vmem:[#allocation5 + $0x2e0] sm:$0xff]
    %v202 = vld [vmem:[#allocation5 + $0x2e8] sm:$0xff]
    %v203 = vld [vmem:[#allocation5 + $0x2f0] sm:$0xff]
    %v204 = vld [vmem:[#allocation5 + $0x2f8] sm:$0xff]
    %v205 = vld [vmem:[#allocation5 + $0x300] sm:$0xff]
    %v206 = vld [vmem:[#allocation5 + $0x308] sm:$0xff]
    %v207 = vld [vmem:[#allocation5 + $0x310] sm:$0xff]
    %v208 = vld [vmem:[#allocation5 + $0x318] sm:$0xff]
    %v209 = vld [vmem:[#allocation5 + $0x320] sm:$0xff]
    %v210 = vld [vmem:[#allocation5 + $0x328] sm:$0xff]
    %v211 = vld [vmem:[#allocation5 + $0x330] sm:$0xff]
    %v212 = vld [vmem:[#allocation5 + $0x338] sm:$0xff]
    %v213 = vld [vmem:[#allocation5 + $0x340] sm:$0xff]
    %v214 = vld [vmem:[#allocation5 + $0x348] sm:$0xff]
    %v215 = vld [vmem:[#allocation5 + $0x350] sm:$0xff]
    %v216 = vld [vmem:[#allocation5 + $0x358] sm:$0xff]
    %v217 = vld [vmem:[#allocation5 + $0x360] sm:$0xff]
    %v218 = vld [vmem:[#allocation5 + $0x368] sm:$0xff]
    %v219 = vld [vmem:[#allocation5 + $0x370] sm:$0xff]
    %v220 = vld [vmem:[#allocation5 + $0x378] sm:$0xff]
    %v221 = vld [vmem:[#allocation5 + $0x380] sm:$0xff]
    %v222 = vld [vmem:[#allocation5 + $0x388] sm:$0xff]
    %v223 = vld [vmem:[#allocation5 + $0x390] sm:$0xff]
    %v224 = vld [vmem:[#allocation5 + $0x398] sm:$0xff]
    %v225 = vld [vmem:[#allocation5 + $0x3a0] sm:$0xff]
    %v226 = vld [vmem:[#allocation5 + $0x3a8] sm:$0xff]
    %v227 = vld [vmem:[#allocation5 + $0x3b0] sm:$0xff]
    %v228 = vld [vmem:[#allocation5 + $0x3b8] sm:$0xff]
    %v229 = vld [vmem:[#allocation5 + $0x3c0] sm:$0xff]
    %v230 = vld [vmem:[#allocation5 + $0x3c8] sm:$0xff]
    %v231 = vld [vmem:[#allocation5 + $0x3d0] sm:$0xff]
    %v232 = vld [vmem:[#allocation5 + $0x3d8] sm:$0xff]
    %v233 = vld [vmem:[#allocation5 + $0x3e0] sm:$0xff]
    %v234 = vld [vmem:[#allocation5 + $0x3e8] sm:$0xff]
    %v235 = vld [vmem:[#allocation5 + $0x3f0] sm:$0xff]
    %v236 = vld [vmem:[#allocation5 + $0x3f8] sm:$0xff]
    %v237 = vld [vmem:[#allocation5 + $0x400] sm:$0xff]
    %v238 = vld [vmem:[#allocation5 + $0x408] sm:$0xff]
    %v239 = vld [vmem:[#allocation5 + $0x410] sm:$0xff]
    %v240 = vld [vmem:[#allocation5 + $0x418] sm:$0xff]
    %v241 = vld [vmem:[#allocation5 + $0x420] sm:$0xff]
    %v242 = vld [vmem:[#allocation5 + $0x428] sm:$0xff]
    %v243 = vld [vmem:[#allocation5 + $0x430] sm:$0xff]
    %v244 = vld [vmem:[#allocation5 + $0x438] sm:$0xff]
    %v245 = vld [vmem:[#allocation5 + $0x440] sm:$0xff]
    %v246 = vld [vmem:[#allocation5 + $0x448] sm:$0xff]
    %v247 = vld [vmem:[#allocation5 + $0x450] sm:$0xff]
    %v248 = vld [vmem:[#allocation5 + $0x458] sm:$0xff]
    %v249 = vld [vmem:[#allocation5 + $0x460] sm:$0xff]
    %v250 = vld [vmem:[#allocation5 + $0x468] sm:$0xff]
    %v251 = vld [vmem:[#allocation5 + $0x470] sm:$0xff]
    %v252 = vld [vmem:[#allocation5 + $0x478] sm:$0xff]
    %v253 = vld [vmem:[#allocation5 + $0x480] sm:$0xff]
    %v254 = vld [vmem:[#allocation5 + $0x488] sm:$0xff]
    %v255 = vld [vmem:[#allocation5 + $0x490] sm:$0xff]
    %v256 = vld [vmem:[#allocation5 + $0x498] sm:$0xff]
    %v257 = vld [vmem:[#allocation5 + $0x4a0] sm:$0xff]
    %v258 = vld [vmem:[#allocation5 + $0x4a8] sm:$0xff]
    %v259 = vld [vmem:[#allocation5 + $0x4b0] sm:$0xff]
    %v260 = vld [vmem:[#allocation5 + $0x4b8] sm:$0xff]
    %v261 = vld [vmem:[#allocation5 + $0x4c0] sm:$0xff]
    %v262 = vld [vmem:[#allocation5 + $0x4c8] sm:$0xff]
    %v263 = vld [vmem:[#allocation5 + $0x4d0] sm:$0xff]
    %v264 = vld [vmem:[#allocation5 + $0x4d8] sm:$0xff]
    %v265 = vld [vmem:[#allocation5 + $0x4e0] sm:$0xff]
    %v266 = vld [vmem:[#allocation5 + $0x4e8] sm:$0xff]
    %v267 = vld [vmem:[#allocation5 + $0x4f0] sm:$0xff]
    %v268 = vld [vmem:[#allocation5 + $0x4f8] sm:$0xff]
    %v269 = vld [vmem:[#allocation5 + $0x500] sm:$0xff]
    %v270 = vld [vmem:[#allocation5 + $0x508] sm:$0xff]
    %v271 = vld [vmem:[#allocation5 + $0x510] sm:$0xff]
    %v272 = vld [vmem:[#allocation5 + $0x518] sm:$0xff]
    %v273 = vld [vmem:[#allocation5 + $0x520] sm:$0xff]
    %v274 = vld [vmem:[#allocation5 + $0x528] sm:$0xff]
    %v275 = vld [vmem:[#allocation5 + $0x530] sm:$0xff]
    %v276 = vld [vmem:[#allocation5 + $0x538] sm:$0xff]
    %v277 = vld [vmem:[#allocation5 + $0x540] sm:$0xff]
    %v278 = vld [vmem:[#allocation5 + $0x548] sm:$0xff]
    %v279 = vld [vmem:[#allocation5 + $0x550] sm:$0xff]
    %v280 = vld [vmem:[#allocation5 + $0x558] sm:$0xff]
    %v281 = vld [vmem:[#allocation5 + $0x560] sm:$0xff]
    %v282 = vld [vmem:[#allocation5 + $0x568] sm:$0xff]
    %v283 = vld [vmem:[#allocation5 + $0x570] sm:$0xff]
    %v284 = vld [vmem:[#allocation5 + $0x578] sm:$0xff]
    %v285 = vld [vmem:[#allocation5 + $0x580] sm:$0xff]
    %v286 = vld [vmem:[#allocation5 + $0x588] sm:$0xff]
    %v287 = vld [vmem:[#allocation5 + $0x590] sm:$0xff]
    %v288 = vld [vmem:[#allocation5 + $0x598] sm:$0xff]
    %v289 = vld [vmem:[#allocation5 + $0x5a0] sm:$0xff]
    %v290 = vld [vmem:[#allocation5 + $0x5a8] sm:$0xff]
    %v291 = vld [vmem:[#allocation5 + $0x5b0] sm:$0xff]
    %v292 = vld [vmem:[#allocation5 + $0x5b8] sm:$0xff]
    %v293 = vld [vmem:[#allocation5 + $0x5c0] sm:$0xff]
    %v294 = vld [vmem:[#allocation5 + $0x5c8] sm:$0xff]
    %v295 = vld [vmem:[#allocation5 + $0x5d0] sm:$0xff]
    %v296 = vld [vmem:[#allocation5 + $0x5d8] sm:$0xff]
    %v297 = vld [vmem:[#allocation5 + $0x5e0] sm:$0xff]
    %v298 = vld [vmem:[#allocation5 + $0x5e8] sm:$0xff]
    %v299 = vld [vmem:[#allocation5 + $0x5f0] sm:$0xff]
    %v300 = vld [vmem:[#allocation5 + $0x5f8] sm:$0xff]
    %v301 = vld [vmem:[#allocation5 + $0x600] sm:$0xff]
    %v302 = vld [vmem:[#allocation5 + $0x608] sm:$0xff]
    %v303 = vld [vmem:[#allocation5 + $0x610] sm:$0xff]
    %v304 = vld [vmem:[#allocation5 + $0x618] sm:$0xff]
    %v305 = vld [vmem:[%s2] sm:$0xf]
    %v307 = vlaneseq
    %v308 = vshrl.u32 %v307, 7
    %v309 = vsub.s32 0, %v308
    %v310 = vrot.slane %v305, %v309
    %v311 = vlaneseq
    %v312 = vshrl.u32 %v311, 7
    %v313 = vsub.s32 1, %v312
    %v314 = vrot.slane %v305, %v313
    %v315 = vlaneseq
    %v316 = vshrl.u32 %v315, 7
    %v317 = vsub.s32 2, %v316
    %v318 = vrot.slane %v305, %v317
    %v319 = vlaneseq
    %v320 = vshrl.u32 %v319, 7
    %v321 = vsub.s32 3, %v320
    %v322 = vrot.slane %v305, %v321
    %v523 = vunpack.c.l.b16 %v109
    %v524 = vunpack.c.h.b16 %v109
    %v525 = vunpack.c.l.b16 %v110
    %v526 = vunpack.c.h.b16 %v110
    %v527 = vunpack.c.l.b16 %v111
    %v528 = vunpack.c.h.b16 %v111
    %v529 = vunpack.c.l.b16 %v112
    %v530 = vunpack.c.h.b16 %v112
    %v531 = vunpack.c.l.b16 %v113
    %v532 = vunpack.c.h.b16 %v113
    %v533 = vunpack.c.l.b16 %v114
    %v534 = vunpack.c.h.b16 %v114
    %v535 = vunpack.c.l.b16 %v115
    %v536 = vunpack.c.h.b16 %v115
    %v537 = vunpack.c.l.b16 %v116
    %v538 = vunpack.c.h.b16 %v116
    %v539 = vunpack.c.l.b16 %v117
    %v540 = vunpack.c.h.b16 %v117
    %v541 = vunpack.c.l.b16 %v118
    %v542 = vunpack.c.h.b16 %v118
    %v543 = vunpack.c.l.b16 %v119
    %v544 = vunpack.c.h.b16 %v119
    %v545 = vunpack.c.l.b16 %v120
    %v546 = vunpack.c.h.b16 %v120
    %v547 = vunpack.c.l.b16 %v121
    %v548 = vunpack.c.h.b16 %v121
    %v549 = vunpack.c.l.b16 %v122
    %v550 = vunpack.c.h.b16 %v122
    %v551 = vunpack.c.l.b16 %v123
    %v552 = vunpack.c.h.b16 %v123
    %v553 = vunpack.c.l.b16 %v124
    %v554 = vunpack.c.h.b16 %v124
    %v555 = vunpack.c.l.b16 %v125
    %v556 = vunpack.c.h.b16 %v125
    %v557 = vunpack.c.l.b16 %v126
    %v558 = vunpack.c.h.b16 %v126
    %v559 = vunpack.c.l.b16 %v127
    %v560 = vunpack.c.h.b16 %v127
    %v561 = vunpack.c.l.b16 %v128
    %v562 = vunpack.c.h.b16 %v128
    %v563 = vunpack.c.l.b16 %v129
    %v564 = vunpack.c.h.b16 %v129
    %v565 = vunpack.c.l.b16 %v130
    %v566 = vunpack.c.h.b16 %v130
    %v567 = vunpack.c.l.b16 %v131
    %v568 = vunpack.c.h.b16 %v131
    %v569 = vunpack.c.l.b16 %v132
    %v570 = vunpack.c.h.b16 %v132
    %v571 = vunpack.c.l.b16 %v133
    %v572 = vunpack.c.h.b16 %v133
    %v573 = vunpack.c.l.b16 %v134
    %v574 = vunpack.c.h.b16 %v134
    %v575 = vunpack.c.l.b16 %v135
    %v576 = vunpack.c.h.b16 %v135
    %v577 = vunpack.c.l.b16 %v136
    %v578 = vunpack.c.h.b16 %v136
    %v579 = vunpack.c.l.b16 %v137
    %v580 = vunpack.c.h.b16 %v137
    %v581 = vunpack.c.l.b16 %v138
    %v582 = vunpack.c.h.b16 %v138
    %v583 = vunpack.c.l.b16 %v139
    %v584 = vunpack.c.h.b16 %v139
    %v585 = vunpack.c.l.b16 %v140
    %v586 = vunpack.c.h.b16 %v140
    %v587 = vunpack.c.l.b16 %v141
    %v588 = vunpack.c.h.b16 %v141
    %v589 = vunpack.c.l.b16 %v142
    %v590 = vunpack.c.h.b16 %v142
    %v591 = vunpack.c.l.b16 %v143
    %v592 = vunpack.c.h.b16 %v143
    %v593 = vunpack.c.l.b16 %v144
    %v594 = vunpack.c.h.b16 %v144
    %v595 = vunpack.c.l.b16 %v145
    %v596 = vunpack.c.h.b16 %v145
    %v597 = vunpack.c.l.b16 %v146
    %v598 = vunpack.c.h.b16 %v146
    %v599 = vunpack.c.l.b16 %v147
    %v600 = vunpack.c.h.b16 %v147
    %v601 = vunpack.c.l.b16 %v148
    %v602 = vunpack.c.h.b16 %v148
    %v603 = vunpack.c.l.b16 %v149
    %v604 = vunpack.c.h.b16 %v149
    %v605 = vunpack.c.l.b16 %v150
    %v606 = vunpack.c.h.b16 %v150
    %v607 = vunpack.c.l.b16 %v151
    %v608 = vunpack.c.h.b16 %v151
    %v609 = vunpack.c.l.b16 %v152
    %v610 = vunpack.c.h.b16 %v152
    %v611 = vunpack.c.l.b16 %v153
    %v612 = vunpack.c.h.b16 %v153
    %v613 = vunpack.c.l.b16 %v154
    %v614 = vunpack.c.h.b16 %v154
    %v615 = vunpack.c.l.b16 %v155
    %v616 = vunpack.c.h.b16 %v155
    %v617 = vunpack.c.l.b16 %v156
    %v618 = vunpack.c.h.b16 %v156
    %v619 = vunpack.c.l.b16 %v157
    %v620 = vunpack.c.h.b16 %v157
    %v621 = vunpack.c.l.b16 %v158
    %v622 = vunpack.c.h.b16 %v158
    %v623 = vunpack.c.l.b16 %v159
    %v624 = vunpack.c.h.b16 %v159
    %v625 = vunpack.c.l.b16 %v160
    %v626 = vunpack.c.h.b16 %v160
    %v627 = vunpack.c.l.b16 %v161
    %v628 = vunpack.c.h.b16 %v161
    %v629 = vunpack.c.l.b16 %v162
    %v630 = vunpack.c.h.b16 %v162
    %v631 = vunpack.c.l.b16 %v163
    %v632 = vunpack.c.h.b16 %v163
    %v633 = vunpack.c.l.b16 %v164
    %v634 = vunpack.c.h.b16 %v164
    %v635 = vunpack.c.l.b16 %v165
    %v636 = vunpack.c.h.b16 %v165
    %v637 = vunpack.c.l.b16 %v166
    %v638 = vunpack.c.h.b16 %v166
    %v639 = vunpack.c.l.b16 %v167
    %v640 = vunpack.c.h.b16 %v167
    %v641 = vunpack.c.l.b16 %v168
    %v642 = vunpack.c.h.b16 %v168
    %v643 = vunpack.c.l.b16 %v169
    %v644 = vunpack.c.h.b16 %v169
    %v645 = vunpack.c.l.b16 %v170
    %v646 = vunpack.c.h.b16 %v170
    %v647 = vunpack.c.l.b16 %v171
    %v648 = vunpack.c.h.b16 %v171
    %v649 = vunpack.c.l.b16 %v172
    %v650 = vunpack.c.h.b16 %v172
    %v651 = vunpack.c.l.b16 %v173
    %v652 = vunpack.c.h.b16 %v173
    %v653 = vunpack.c.l.b16 %v174
    %v654 = vunpack.c.h.b16 %v174
    %v655 = vunpack.c.l.b16 %v175
    %v656 = vunpack.c.h.b16 %v175
    %v657 = vunpack.c.l.b16 %v176
    %v658 = vunpack.c.h.b16 %v176
    %v659 = vunpack.c.l.b16 %v177
    %v660 = vunpack.c.h.b16 %v177
    %v661 = vunpack.c.l.b16 %v178
    %v662 = vunpack.c.h.b16 %v178
    %v663 = vunpack.c.l.b16 %v179
    %v664 = vunpack.c.h.b16 %v179
    %v665 = vunpack.c.l.b16 %v180
    %v666 = vunpack.c.h.b16 %v180
    %v667 = vunpack.c.l.b16 %v181
    %v668 = vunpack.c.h.b16 %v181
    %v669 = vunpack.c.l.b16 %v182
    %v670 = vunpack.c.h.b16 %v182
    %v671 = vunpack.c.l.b16 %v183
    %v672 = vunpack.c.h.b16 %v183
    %v673 = vunpack.c.l.b16 %v184
    %v674 = vunpack.c.h.b16 %v184
    %v675 = vunpack.c.l.b16 %v185
    %v676 = vunpack.c.h.b16 %v185
    %v677 = vunpack.c.l.b16 %v186
    %v678 = vunpack.c.h.b16 %v186
    %v679 = vunpack.c.l.b16 %v187
    %v680 = vunpack.c.h.b16 %v187
    %v681 = vunpack.c.l.b16 %v188
    %v682 = vunpack.c.h.b16 %v188
    %v683 = vunpack.c.l.b16 %v189
    %v684 = vunpack.c.h.b16 %v189
    %v685 = vunpack.c.l.b16 %v190
    %v686 = vunpack.c.h.b16 %v190
    %v687 = vunpack.c.l.b16 %v191
    %v688 = vunpack.c.h.b16 %v191
    %v689 = vunpack.c.l.b16 %v192
    %v690 = vunpack.c.h.b16 %v192
    %v691 = vunpack.c.l.b16 %v193
    %v692 = vunpack.c.h.b16 %v193
    %v693 = vunpack.c.l.b16 %v194
    %v694 = vunpack.c.h.b16 %v194
    %v695 = vunpack.c.l.b16 %v195
    %v696 = vunpack.c.h.b16 %v195
    %v697 = vunpack.c.l.b16 %v196
    %v698 = vunpack.c.h.b16 %v196
    %v699 = vunpack.c.l.b16 %v197
    %v700 = vunpack.c.h.b16 %v197
    %v701 = vunpack.c.l.b16 %v198
    %v702 = vunpack.c.h.b16 %v198
    %v703 = vunpack.c.l.b16 %v199
    %v704 = vunpack.c.h.b16 %v199
    %v705 = vunpack.c.l.b16 %v200
    %v706 = vunpack.c.h.b16 %v200
    %v707 = vunpack.c.l.b16 %v201
    %v708 = vunpack.c.h.b16 %v201
    %v709 = vunpack.c.l.b16 %v202
    %v710 = vunpack.c.h.b16 %v202
    %v711 = vunpack.c.l.b16 %v203
    %v712 = vunpack.c.h.b16 %v203
    %v713 = vunpack.c.l.b16 %v204
    %v714 = vunpack.c.h.b16 %v204
    %v715 = vunpack.c.l.b16 %v205
    %v716 = vunpack.c.h.b16 %v205
    %v717 = vunpack.c.l.b16 %v206
    %v718 = vunpack.c.h.b16 %v206
    %v719 = vunpack.c.l.b16 %v207
    %v720 = vunpack.c.h.b16 %v207
    %v721 = vunpack.c.l.b16 %v208
    %v722 = vunpack.c.h.b16 %v208
    %v723 = vunpack.c.l.b16 %v209
    %v724 = vunpack.c.h.b16 %v209
    %v725 = vunpack.c.l.b16 %v210
    %v726 = vunpack.c.h.b16 %v210
    %v727 = vunpack.c.l.b16 %v211
    %v728 = vunpack.c.h.b16 %v211
    %v729 = vunpack.c.l.b16 %v212
    %v730 = vunpack.c.h.b16 %v212
    %v731 = vunpack.c.l.b16 %v213
    %v732 = vunpack.c.h.b16 %v213
    %v733 = vunpack.c.l.b16 %v214
    %v734 = vunpack.c.h.b16 %v214
    %v735 = vunpack.c.l.b16 %v215
    %v736 = vunpack.c.h.b16 %v215
    %v737 = vunpack.c.l.b16 %v216
    %v738 = vunpack.c.h.b16 %v216
    %v739 = vunpack.c.l.b16 %v217
    %v740 = vunpack.c.h.b16 %v217
    %v741 = vunpack.c.l.b16 %v218
    %v742 = vunpack.c.h.b16 %v218
    %v743 = vunpack.c.l.b16 %v219
    %v744 = vunpack.c.h.b16 %v219
    %v745 = vunpack.c.l.b16 %v220
    %v746 = vunpack.c.h.b16 %v220
    %v747 = vunpack.c.l.b16 %v221
    %v748 = vunpack.c.h.b16 %v221
    %v749 = vunpack.c.l.b16 %v222
    %v750 = vunpack.c.h.b16 %v222
    %v751 = vunpack.c.l.b16 %v223
    %v752 = vunpack.c.h.b16 %v223
    %v753 = vunpack.c.l.b16 %v224
    %v754 = vunpack.c.h.b16 %v224
    %v755 = vunpack.c.l.b16 %v225
    %v756 = vunpack.c.h.b16 %v225
    %v757 = vunpack.c.l.b16 %v226
    %v758 = vunpack.c.h.b16 %v226
    %v759 = vunpack.c.l.b16 %v227
    %v760 = vunpack.c.h.b16 %v227
    %v761 = vunpack.c.l.b16 %v228
    %v762 = vunpack.c.h.b16 %v228
    %v763 = vunpack.c.l.b16 %v229
    %v764 = vunpack.c.h.b16 %v229
    %v765 = vunpack.c.l.b16 %v230
    %v766 = vunpack.c.h.b16 %v230
    %v767 = vunpack.c.l.b16 %v231
    %v768 = vunpack.c.h.b16 %v231
    %v769 = vunpack.c.l.b16 %v232
    %v770 = vunpack.c.h.b16 %v232
    %v771 = vunpack.c.l.b16 %v233
    %v772 = vunpack.c.h.b16 %v233
    %v773 = vunpack.c.l.b16 %v234
    %v774 = vunpack.c.h.b16 %v234
    %v775 = vunpack.c.l.b16 %v235
    %v776 = vunpack.c.h.b16 %v235
    %v777 = vunpack.c.l.b16 %v236
    %v778 = vunpack.c.h.b16 %v236
    %v779 = vunpack.c.l.b16 %v237
    %v780 = vunpack.c.h.b16 %v237
    %v781 = vunpack.c.l.b16 %v238
    %v782 = vunpack.c.h.b16 %v238
    %v783 = vunpack.c.l.b16 %v239
    %v784 = vunpack.c.h.b16 %v239
    %v785 = vunpack.c.l.b16 %v240
    %v786 = vunpack.c.h.b16 %v240
    %v787 = vunpack.c.l.b16 %v241
    %v788 = vunpack.c.h.b16 %v241
    %v789 = vunpack.c.l.b16 %v242
    %v790 = vunpack.c.h.b16 %v242
    %v791 = vunpack.c.l.b16 %v243
    %v792 = vunpack.c.h.b16 %v243
    %v793 = vunpack.c.l.b16 %v244
    %v794 = vunpack.c.h.b16 %v244
    %v795 = vunpack.c.l.b16 %v245
    %v796 = vunpack.c.h.b16 %v245
    %v797 = vunpack.c.l.b16 %v246
    %v798 = vunpack.c.h.b16 %v246
    %v799 = vunpack.c.l.b16 %v247
    %v800 = vunpack.c.h.b16 %v247
    %v801 = vunpack.c.l.b16 %v248
    %v802 = vunpack.c.h.b16 %v248
    %v803 = vunpack.c.l.b16 %v249
    %v804 = vunpack.c.h.b16 %v249
    %v805 = vunpack.c.l.b16 %v250
    %v806 = vunpack.c.h.b16 %v250
    %v807 = vunpack.c.l.b16 %v251
    %v808 = vunpack.c.h.b16 %v251
    %v809 = vunpack.c.l.b16 %v252
    %v810 = vunpack.c.h.b16 %v252
    %v811 = vunpack.c.l.b16 %v253
    %v812 = vunpack.c.h.b16 %v253
    %v813 = vunpack.c.l.b16 %v254
    %v814 = vunpack.c.h.b16 %v254
    %v815 = vunpack.c.l.b16 %v255
    %v816 = vunpack.c.h.b16 %v255
    %v817 = vunpack.c.l.b16 %v256
    %v818 = vunpack.c.h.b16 %v256
    %v819 = vunpack.c.l.b16 %v257
    %v820 = vunpack.c.h.b16 %v257
    %v821 = vunpack.c.l.b16 %v258
    %v822 = vunpack.c.h.b16 %v258
    %v823 = vunpack.c.l.b16 %v259
    %v824 = vunpack.c.h.b16 %v259
    %v825 = vunpack.c.l.b16 %v260
    %v826 = vunpack.c.h.b16 %v260
    %v827 = vunpack.c.l.b16 %v261
    %v828 = vunpack.c.h.b16 %v261
    %v829 = vunpack.c.l.b16 %v262
    %v830 = vunpack.c.h.b16 %v262
    %v831 = vunpack.c.l.b16 %v263
    %v832 = vunpack.c.h.b16 %v263
    %v833 = vunpack.c.l.b16 %v264
    %v834 = vunpack.c.h.b16 %v264
    %v835 = vunpack.c.l.b16 %v265
    %v836 = vunpack.c.h.b16 %v265
    %v837 = vunpack.c.l.b16 %v266
    %v838 = vunpack.c.h.b16 %v266
    %v839 = vunpack.c.l.b16 %v267
    %v840 = vunpack.c.h.b16 %v267
    %v841 = vunpack.c.l.b16 %v268
    %v842 = vunpack.c.h.b16 %v268
    %v843 = vunpack.c.l.b16 %v269
    %v844 = vunpack.c.h.b16 %v269
    %v845 = vunpack.c.l.b16 %v270
    %v846 = vunpack.c.h.b16 %v270
    %v847 = vunpack.c.l.b16 %v271
    %v848 = vunpack.c.h.b16 %v271
    %v849 = vunpack.c.l.b16 %v272
    %v850 = vunpack.c.h.b16 %v272
    %v851 = vunpack.c.l.b16 %v273
    %v852 = vunpack.c.h.b16 %v273
    %v853 = vunpack.c.l.b16 %v274
    %v854 = vunpack.c.h.b16 %v274
    %v855 = vunpack.c.l.b16 %v275
    %v856 = vunpack.c.h.b16 %v275
    %v857 = vunpack.c.l.b16 %v276
    %v858 = vunpack.c.h.b16 %v276
    %v859 = vunpack.c.l.b16 %v277
    %v860 = vunpack.c.h.b16 %v277
    %v861 = vunpack.c.l.b16 %v278
    %v862 = vunpack.c.h.b16 %v278
    %v863 = vunpack.c.l.b16 %v279
    %v864 = vunpack.c.h.b16 %v279
    %v865 = vunpack.c.l.b16 %v280
    %v866 = vunpack.c.h.b16 %v280
    %v867 = vunpack.c.l.b16 %v281
    %v868 = vunpack.c.h.b16 %v281
    %v869 = vunpack.c.l.b16 %v282
    %v870 = vunpack.c.h.b16 %v282
    %v871 = vunpack.c.l.b16 %v283
    %v872 = vunpack.c.h.b16 %v283
    %v873 = vunpack.c.l.b16 %v284
    %v874 = vunpack.c.h.b16 %v284
    %v875 = vunpack.c.l.b16 %v285
    %v876 = vunpack.c.h.b16 %v285
    %v877 = vunpack.c.l.b16 %v286
    %v878 = vunpack.c.h.b16 %v286
    %v879 = vunpack.c.l.b16 %v287
    %v880 = vunpack.c.h.b16 %v287
    %v881 = vunpack.c.l.b16 %v288
    %v882 = vunpack.c.h.b16 %v288
    %v883 = vunpack.c.l.b16 %v289
    %v884 = vunpack.c.h.b16 %v289
    %v885 = vunpack.c.l.b16 %v290
    %v886 = vunpack.c.h.b16 %v290
    %v887 = vunpack.c.l.b16 %v291
    %v888 = vunpack.c.h.b16 %v291
    %v889 = vunpack.c.l.b16 %v292
    %v890 = vunpack.c.h.b16 %v292
    %v891 = vunpack.c.l.b16 %v293
    %v892 = vunpack.c.h.b16 %v293
    %v893 = vunpack.c.l.b16 %v294
    %v894 = vunpack.c.h.b16 %v294
    %v895 = vunpack.c.l.b16 %v295
    %v896 = vunpack.c.h.b16 %v295
    %v897 = vunpack.c.l.b16 %v296
    %v898 = vunpack.c.h.b16 %v296
    %v899 = vunpack.c.l.b16 %v297
    %v900 = vunpack.c.h.b16 %v297
    %v901 = vunpack.c.l.b16 %v298
    %v902 = vunpack.c.h.b16 %v298
    %v903 = vunpack.c.l.b16 %v299
    %v904 = vunpack.c.h.b16 %v299
    %v905 = vunpack.c.l.b16 %v300
    %v906 = vunpack.c.h.b16 %v300
    %v907 = vunpack.c.l.b16 %v301
    %v908 = vunpack.c.h.b16 %v301
    %v909 = vunpack.c.l.b16 %v302
    %v910 = vunpack.c.h.b16 %v302
    %v911 = vunpack.c.l.b16 %v303
    %v912 = vunpack.c.h.b16 %v303
    %v913 = vunpack.c.l.b16 %v304
    %v914 = vunpack.c.h.b16 %v304
    %v915 = vpack.c.b16 %v527, %v523
    %v916 = vpack.c.b16 %v528, %v524
    %v917 = vpack.c.b16 %v529, %v525
    %v918 = vpack.c.b16 %v530, %v526
    %v919 = vpack.c.b16 %v535, %v531
    %v920 = vpack.c.b16 %v536, %v532
    %v921 = vpack.c.b16 %v537, %v533
    %v922 = vpack.c.b16 %v538, %v534
    %v923 = vpack.c.b16 %v543, %v539
    %v924 = vpack.c.b16 %v544, %v540
    %v925 = vpack.c.b16 %v545, %v541
    %v926 = vpack.c.b16 %v546, %v542
    %v927 = vpack.c.b16 %v551, %v547
    %v928 = vpack.c.b16 %v552, %v548
    %v929 = vpack.c.b16 %v553, %v549
    %v930 = vpack.c.b16 %v554, %v550
    %v931 = vpack.c.b16 %v559, %v555
    %v932 = vpack.c.b16 %v560, %v556
    %v933 = vpack.c.b16 %v561, %v557
    %v934 = vpack.c.b16 %v562, %v558
    %v935 = vpack.c.b16 %v567, %v563
    %v936 = vpack.c.b16 %v568, %v564
    %v937 = vpack.c.b16 %v569, %v565
    %v938 = vpack.c.b16 %v570, %v566
    %v939 = vpack.c.b16 %v575, %v571
    %v940 = vpack.c.b16 %v576, %v572
    %v941 = vpack.c.b16 %v577, %v573
    %v942 = vpack.c.b16 %v578, %v574
    %v943 = vpack.c.b16 %v583, %v579
    %v944 = vpack.c.b16 %v584, %v580
    %v945 = vpack.c.b16 %v585, %v581
    %v946 = vpack.c.b16 %v586, %v582
    %v947 = vpack.c.b16 %v591, %v587
    %v948 = vpack.c.b16 %v592, %v588
    %v949 = vpack.c.b16 %v593, %v589
    %v950 = vpack.c.b16 %v594, %v590
    %v951 = vpack.c.b16 %v599, %v595
    %v952 = vpack.c.b16 %v600, %v596
    %v953 = vpack.c.b16 %v601, %v597
    %v954 = vpack.c.b16 %v602, %v598
    %v955 = vpack.c.b16 %v607, %v603
    %v956 = vpack.c.b16 %v608, %v604
    %v957 = vpack.c.b16 %v609, %v605
    %v958 = vpack.c.b16 %v610, %v606
    %v959 = vpack.c.b16 %v615, %v611
    %v960 = vpack.c.b16 %v616, %v612
    %v961 = vpack.c.b16 %v617, %v613
    %v962 = vpack.c.b16 %v618, %v614
    %v963 = vpack.c.b16 %v623, %v619
    %v964 = vpack.c.b16 %v624, %v620
    %v965 = vpack.c.b16 %v625, %v621
    %v966 = vpack.c.b16 %v626, %v622
    %v967 = vpack.c.b16 %v631, %v627
    %v968 = vpack.c.b16 %v632, %v628
    %v969 = vpack.c.b16 %v633, %v629
    %v970 = vpack.c.b16 %v634, %v630
    %v971 = vpack.c.b16 %v639, %v635
    %v972 = vpack.c.b16 %v640, %v636
    %v973 = vpack.c.b16 %v641, %v637
    %v974 = vpack.c.b16 %v642, %v638
    %v975 = vpack.c.b16 %v647, %v643
    %v976 = vpack.c.b16 %v648, %v644
    %v977 = vpack.c.b16 %v649, %v645
    %v978 = vpack.c.b16 %v650, %v646
    %v979 = vpack.c.b16 %v655, %v651
    %v980 = vpack.c.b16 %v656, %v652
    %v981 = vpack.c.b16 %v657, %v653
    %v982 = vpack.c.b16 %v658, %v654
    %v983 = vpack.c.b16 %v663, %v659
    %v984 = vpack.c.b16 %v664, %v660
    %v985 = vpack.c.b16 %v665, %v661
    %v986 = vpack.c.b16 %v666, %v662
    %v987 = vpack.c.b16 %v671, %v667
    %v988 = vpack.c.b16 %v672, %v668
    %v989 = vpack.c.b16 %v673, %v669
    %v990 = vpack.c.b16 %v674, %v670
    %v991 = vpack.c.b16 %v679, %v675
    %v992 = vpack.c.b16 %v680, %v676
    %v993 = vpack.c.b16 %v681, %v677
    %v994 = vpack.c.b16 %v682, %v678
    %v995 = vpack.c.b16 %v687, %v683
    %v996 = vpack.c.b16 %v688, %v684
    %v997 = vpack.c.b16 %v689, %v685
    %v998 = vpack.c.b16 %v690, %v686
    %v999 = vpack.c.b16 %v695, %v691
    %v1000 = vpack.c.b16 %v696, %v692
    %v1001 = vpack.c.b16 %v697, %v693
    %v1002 = vpack.c.b16 %v698, %v694
    %v1003 = vpack.c.b16 %v703, %v699
    %v1004 = vpack.c.b16 %v704, %v700
    %v1005 = vpack.c.b16 %v705, %v701
    %v1006 = vpack.c.b16 %v706, %v702
    %v1007 = vpack.c.b16 %v711, %v707
    %v1008 = vpack.c.b16 %v712, %v708
    %v1009 = vpack.c.b16 %v713, %v709
    %v1010 = vpack.c.b16 %v714, %v710
    %v1011 = vpack.c.b16 %v719, %v715
    %v1012 = vpack.c.b16 %v720, %v716
    %v1013 = vpack.c.b16 %v721, %v717
    %v1014 = vpack.c.b16 %v722, %v718
    %v1015 = vpack.c.b16 %v727, %v723
    %v1016 = vpack.c.b16 %v728, %v724
    %v1017 = vpack.c.b16 %v729, %v725
    %v1018 = vpack.c.b16 %v730, %v726
    %v1019 = vpack.c.b16 %v735, %v731
    %v1020 = vpack.c.b16 %v736, %v732
    %v1021 = vpack.c.b16 %v737, %v733
    %v1022 = vpack.c.b16 %v738, %v734
    %v1023 = vpack.c.b16 %v743, %v739
    %v1024 = vpack.c.b16 %v744, %v740
    %v1025 = vpack.c.b16 %v745, %v741
    %v1026 = vpack.c.b16 %v746, %v742
    %v1027 = vpack.c.b16 %v751, %v747
    %v1028 = vpack.c.b16 %v752, %v748
    %v1029 = vpack.c.b16 %v753, %v749
    %v1030 = vpack.c.b16 %v754, %v750
    %v1031 = vpack.c.b16 %v759, %v755
    %v1032 = vpack.c.b16 %v760, %v756
    %v1033 = vpack.c.b16 %v761, %v757
    %v1034 = vpack.c.b16 %v762, %v758
    %v1035 = vpack.c.b16 %v767, %v763
    %v1036 = vpack.c.b16 %v768, %v764
    %v1037 = vpack.c.b16 %v769, %v765
    %v1038 = vpack.c.b16 %v770, %v766
    %v1039 = vpack.c.b16 %v775, %v771
    %v1040 = vpack.c.b16 %v776, %v772
    %v1041 = vpack.c.b16 %v777, %v773
    %v1042 = vpack.c.b16 %v778, %v774
    %v1043 = vpack.c.b16 %v783, %v779
    %v1044 = vpack.c.b16 %v784, %v780
    %v1045 = vpack.c.b16 %v785, %v781
    %v1046 = vpack.c.b16 %v786, %v782
    %v1047 = vpack.c.b16 %v791, %v787
    %v1048 = vpack.c.b16 %v792, %v788
    %v1049 = vpack.c.b16 %v793, %v789
    %v1050 = vpack.c.b16 %v794, %v790
    %v1051 = vpack.c.b16 %v799, %v795
    %v1052 = vpack.c.b16 %v800, %v796
    %v1053 = vpack.c.b16 %v801, %v797
    %v1054 = vpack.c.b16 %v802, %v798
    %v1055 = vpack.c.b16 %v807, %v803
    %v1056 = vpack.c.b16 %v808, %v804
    %v1057 = vpack.c.b16 %v809, %v805
    %v1058 = vpack.c.b16 %v810, %v806
    %v1059 = vpack.c.b16 %v815, %v811
    %v1060 = vpack.c.b16 %v816, %v812
    %v1061 = vpack.c.b16 %v817, %v813
    %v1062 = vpack.c.b16 %v818, %v814
    %v1063 = vpack.c.b16 %v823, %v819
    %v1064 = vpack.c.b16 %v824, %v820
    %v1065 = vpack.c.b16 %v825, %v821
    %v1066 = vpack.c.b16 %v826, %v822
    %v1067 = vpack.c.b16 %v831, %v827
    %v1068 = vpack.c.b16 %v832, %v828
    %v1069 = vpack.c.b16 %v833, %v829
    %v1070 = vpack.c.b16 %v834, %v830
    %v1071 = vpack.c.b16 %v839, %v835
    %v1072 = vpack.c.b16 %v840, %v836
    %v1073 = vpack.c.b16 %v841, %v837
    %v1074 = vpack.c.b16 %v842, %v838
    %v1075 = vpack.c.b16 %v847, %v843
    %v1076 = vpack.c.b16 %v848, %v844
    %v1077 = vpack.c.b16 %v849, %v845
    %v1078 = vpack.c.b16 %v850, %v846
    %v1079 = vpack.c.b16 %v855, %v851
    %v1080 = vpack.c.b16 %v856, %v852
    %v1081 = vpack.c.b16 %v857, %v853
    %v1082 = vpack.c.b16 %v858, %v854
    %v1083 = vpack.c.b16 %v863, %v859
    %v1084 = vpack.c.b16 %v864, %v860
    %v1085 = vpack.c.b16 %v865, %v861
    %v1086 = vpack.c.b16 %v866, %v862
    %v1087 = vpack.c.b16 %v871, %v867
    %v1088 = vpack.c.b16 %v872, %v868
    %v1089 = vpack.c.b16 %v873, %v869
    %v1090 = vpack.c.b16 %v874, %v870
    %v1091 = vpack.c.b16 %v879, %v875
    %v1092 = vpack.c.b16 %v880, %v876
    %v1093 = vpack.c.b16 %v881, %v877
    %v1094 = vpack.c.b16 %v882, %v878
    %v1095 = vpack.c.b16 %v887, %v883
    %v1096 = vpack.c.b16 %v888, %v884
    %v1097 = vpack.c.b16 %v889, %v885
    %v1098 = vpack.c.b16 %v890, %v886
    %v1099 = vpack.c.b16 %v895, %v891
    %v1100 = vpack.c.b16 %v896, %v892
    %v1101 = vpack.c.b16 %v897, %v893
    %v1102 = vpack.c.b16 %v898, %v894
    %v1103 = vpack.c.b16 %v903, %v899
    %v1104 = vpack.c.b16 %v904, %v900
    %v1105 = vpack.c.b16 %v905, %v901
    %v1106 = vpack.c.b16 %v906, %v902
    %v1107 = vpack.c.b16 %v911, %v907
    %v1108 = vpack.c.b16 %v912, %v908
    %v1109 = vpack.c.b16 %v913, %v909
    %v1110 = vpack.c.b16 %v914, %v910
    %vm1307 = vcmask 130048
    %v1309 = vsel %vm1307, %v108, 0
    %1311 = vmatprep.subr.bf16.mxu0 %v916
    %1312 = vmatpush1.bf16.msra.mxu0 %v915
    %1313 = vmatprep.subr.bf16.mxu0 %v920
    %1314 = vmatpush1.bf16.msra.mxu0 %v919
    %1315 = vmatprep.subr.bf16.mxu0 %v924
    %1316 = vmatpush1.bf16.msra.mxu0 %v923
    %1317 = vmatprep.subr.bf16.mxu0 %v928
    %1318 = vmatpush1.bf16.msra.mxu0 %v927
    %1319 = vmatprep.subr.bf16.mxu0 %v932
    %1320 = vmatpush1.bf16.msra.mxu0 %v931
    %1321 = vmatprep.subr.bf16.mxu0 %v936
    %1322 = vmatpush1.bf16.msra.mxu0 %v935
    %1323 = vmatprep.subr.bf16.mxu0 %v940
    %1324 = vmatpush1.bf16.msra.mxu0 %v939
    %1325 = vmatprep.subr.bf16.mxu0 %v944
    %1326 = vmatpush1.bf16.msra.mxu0 %v943
    %1327 = vmatprep.subr.bf16.mxu0 %v948
    %1328 = vmatpush1.bf16.msra.mxu0 %v947
    %1329 = vmatprep.subr.bf16.mxu0 %v952
    %1330 = vmatpush1.bf16.msra.mxu0 %v951
    %1331 = vmatprep.subr.bf16.mxu0 %v956
    %1332 = vmatpush1.bf16.msra.mxu0 %v955
    %1333 = vmatprep.subr.bf16.mxu0 %v960
    %1334 = vmatpush1.bf16.msra.mxu0 %v959
    %1335 = vmatprep.subr.bf16.mxu0 %v964
    %1336 = vmatpush1.bf16.msra.mxu0 %v963
    %1337 = vmatprep.subr.bf16.mxu0 %v968
    %1338 = vmatpush1.bf16.msra.mxu0 %v967
    %1339 = vmatprep.subr.bf16.mxu0 %v972
    %1340 = vmatpush1.bf16.msra.mxu0 %v971
    %1341 = vmatprep.subr.bf16.mxu0 %v976
    %1342 = vmatpush1.bf16.msra.mxu0 %v975
    %1343 = vmatprep.mubr.bf16.mxu0 %v103
    %1344 = vmatmul.mubr.bf16.gmra.mrb[0].mxu0 %v102
    %v1345 = vpop.f32.mrb[0].mxu0
    %v1346 = vadd.f32 %v310, %v1345
    %v1347 = vpop.f32.mrb[0].mxu0
    %v1348 = vadd.f32 %v314, %v1347
    %v1349 = vpop.f32.mrb[0].mxu0
    %v1350 = vadd.f32 %v310, %v1349
    %v1351 = vpop.f32.mrb[0].mxu0
    %v1352 = vadd.f32 %v314, %v1351
    %1353 = vdwg.mxu0
    %1354 = vmatprep.subr.bf16.mxu0 %v980
    %1355 = vmatpush1.bf16.msra.mxu0 %v979
    %1356 = vmatprep.subr.bf16.mxu0 %v984
    %1357 = vmatpush1.bf16.msra.mxu0 %v983
    %1358 = vmatprep.subr.bf16.mxu0 %v988
    %1359 = vmatpush1.bf16.msra.mxu0 %v987
    %1360 = vmatprep.subr.bf16.mxu0 %v992
    %1361 = vmatpush1.bf16.msra.mxu0 %v991
    %1362 = vmatprep.subr.bf16.mxu0 %v996
    %1363 = vmatpush1.bf16.msra.mxu0 %v995
    %1364 = vmatprep.subr.bf16.mxu0 %v1000
    %1365 = vmatpush1.bf16.msra.mxu0 %v999
    %1366 = vmatprep.subr.bf16.mxu0 %v1004
    %1367 = vmatpush1.bf16.msra.mxu0 %v1003
    %1368 = vmatprep.subr.bf16.mxu0 %v1008
    %1369 = vmatpush1.bf16.msra.mxu0 %v1007
    %1370 = vmatprep.subr.bf16.mxu0 %v1012
    %1371 = vmatpush1.bf16.msra.mxu0 %v1011
    %1372 = vmatprep.subr.bf16.mxu0 %v1016
    %1373 = vmatpush1.bf16.msra.mxu0 %v1015
    %1374 = vmatprep.subr.bf16.mxu0 %v1020
    %1375 = vmatpush1.bf16.msra.mxu0 %v1019
    %1376 = vmatprep.subr.bf16.mxu0 %v1024
    %1377 = vmatpush1.bf16.msra.mxu0 %v1023
    %1378 = vmatprep.subr.bf16.mxu0 %v1028
    %1379 = vmatpush1.bf16.msra.mxu0 %v1027
    %1380 = vmatprep.subr.bf16.mxu0 %v1032
    %1381 = vmatpush1.bf16.msra.mxu0 %v1031
    %1382 = vmatprep.subr.bf16.mxu0 %v1036
    %1383 = vmatpush1.bf16.msra.mxu0 %v1035
    %1384 = vmatprep.subr.bf16.mxu0 %v1040
    %1385 = vmatpush1.bf16.msra.mxu0 %v1039
    %1386 = vmatprep.mubr.bf16.mxu0 %v105
    %1387 = vmatmul.mubr.bf16.gmra.mrb[0].mxu0 %v104
    %v1388 = vpop.f32.mrb[0].mxu0
    %v1389 = vadd.f32 %v1346, %v1388
    %v1390 = vpop.f32.mrb[0].mxu0
    %v1391 = vadd.f32 %v1348, %v1390
    %v1392 = vpop.f32.mrb[0].mxu0
    %v1393 = vadd.f32 %v1350, %v1392
    %v1394 = vpop.f32.mrb[0].mxu0
    %v1395 = vadd.f32 %v1352, %v1394
    %1396 = vdwg.mxu0
    %1397 = vmatprep.subr.bf16.mxu0 %v1044
    %1398 = vmatpush1.bf16.msra.mxu0 %v1043
    %1399 = vmatprep.subr.bf16.mxu0 %v1048
    %1400 = vmatpush1.bf16.msra.mxu0 %v1047
    %1401 = vmatprep.subr.bf16.mxu0 %v1052
    %1402 = vmatpush1.bf16.msra.mxu0 %v1051
    %1403 = vmatprep.subr.bf16.mxu0 %v1056
    %1404 = vmatpush1.bf16.msra.mxu0 %v1055
    %1405 = vmatprep.subr.bf16.mxu0 %v1060
    %1406 = vmatpush1.bf16.msra.mxu0 %v1059
    %1407 = vmatprep.subr.bf16.mxu0 %v1064
    %1408 = vmatpush1.bf16.msra.mxu0 %v1063
    %1409 = vmatprep.subr.bf16.mxu0 %v1068
    %1410 = vmatpush1.bf16.msra.mxu0 %v1067
    %1411 = vmatprep.subr.bf16.mxu0 %v1072
    %1412 = vmatpush1.bf16.msra.mxu0 %v1071
    %1413 = vmatprep.subr.bf16.mxu0 %v1076
    %1414 = vmatpush1.bf16.msra.mxu0 %v1075
    %1415 = vmatprep.subr.bf16.mxu0 %v1080
    %1416 = vmatpush1.bf16.msra.mxu0 %v1079
    %1417 = vmatprep.subr.bf16.mxu0 %v1084
    %1418 = vmatpush1.bf16.msra.mxu0 %v1083
    %1419 = vmatprep.subr.bf16.mxu0 %v1088
    %1420 = vmatpush1.bf16.msra.mxu0 %v1087
    %1421 = vmatprep.subr.bf16.mxu0 %v1092
    %1422 = vmatpush1.bf16.msra.mxu0 %v1091
    %1423 = vmatprep.subr.bf16.mxu0 %v1096
    %1424 = vmatpush1.bf16.msra.mxu0 %v1095
    %1425 = vmatprep.subr.bf16.mxu0 %v1100
    %1426 = vmatpush1.bf16.msra.mxu0 %v1099
    %1427 = vmatprep.subr.bf16.mxu0 %v1104
    %1428 = vmatpush1.bf16.msra.mxu0 %v1103
    %1429 = vmatprep.mubr.bf16.mxu0 %v107
    %1430 = vmatmul.mubr.bf16.gmra.mrb[0].mxu0 %v106
    %v1431 = vpop.f32.mrb[0].mxu0
    %v1432 = vadd.f32 %v1389, %v1431
    %v1433 = vpop.f32.mrb[0].mxu0
    %v1434 = vadd.f32 %v1391, %v1433
    %v1435 = vpop.f32.mrb[0].mxu0
    %v1436 = vadd.f32 %v1393, %v1435
    %v1437 = vpop.f32.mrb[0].mxu0
    %v1438 = vadd.f32 %v1395, %v1437
    %1439 = vdwg.mxu0
    %1440 = vmatprep.subr.bf16.mxu0 %v1108
    %1441 = vmatpush1.bf16.msra.mxu0 %v1107
    %1442 = vmatprep.subr.bf16.mxu0 0
    %1443 = vmatpush1.bf16.msra.mxu0 0
    %1444 = vmatprep.subr.bf16.mxu0 0
    %1445 = vmatpush1.bf16.msra.mxu0 0
    %1446 = vmatprep.subr.bf16.mxu0 0
    %1447 = vmatpush1.bf16.msra.mxu0 0
    %1448 = vmatprep.subr.bf16.mxu0 0
    %1449 = vmatpush1.bf16.msra.mxu0 0
    %1450 = vmatprep.subr.bf16.mxu0 0
    %1451 = vmatpush1.bf16.msra.mxu0 0
    %1452 = vmatprep.subr.bf16.mxu0 0
    %1453 = vmatpush1.bf16.msra.mxu0 0
    %1454 = vmatprep.subr.bf16.mxu0 0
    %1455 = vmatpush1.bf16.msra.mxu0 0
    %1456 = vmatprep.subr.bf16.mxu0 0
    %1457 = vmatpush1.bf16.msra.mxu0 0
    %1458 = vmatprep.subr.bf16.mxu0 0
    %1459 = vmatpush1.bf16.msra.mxu0 0
    %1460 = vmatprep.subr.bf16.mxu0 0
    %1461 = vmatpush1.bf16.msra.mxu0 0
    %1462 = vmatprep.subr.bf16.mxu0 0
    %1463 = vmatpush1.bf16.msra.mxu0 0
    %1464 = vmatprep.subr.bf16.mxu0 0
    %1465 = vmatpush1.bf16.msra.mxu0 0
    %1466 = vmatprep.subr.bf16.mxu0 0
    %1467 = vmatpush1.bf16.msra.mxu0 0
    %1468 = vmatprep.subr.bf16.mxu0 0
    %1469 = vmatpush1.bf16.msra.mxu0 0
    %1470 = vmatprep.subr.bf16.mxu0 0
    %1471 = vmatpush1.bf16.msra.mxu0 0
    %1472 = vmatprep.mubr.bf16.mxu0 0
    %1473 = vmatmul.mubr.bf16.gmra.mrb[0].mxu0 %v1309
    %v1474 = vpop.f32.mrb[0].mxu0
    %v1475 = vadd.f32 %v1432, %v1474
    %v1476 = vpop.f32.mrb[0].mxu0
    %v1477 = vadd.f32 %v1434, %v1476
    %v1478 = vpop.f32.mrb[0].mxu0
    %v1479 = vadd.f32 %v1436, %v1478
    %v1480 = vpop.f32.mrb[0].mxu0
    %v1481 = vadd.f32 %v1438, %v1480
    %1482 = vdwg.mxu0
    %1483 = vmatprep.subr.bf16.mxu0 %v918
    %1484 = vmatpush1.bf16.msra.mxu0 %v917
    %1485 = vmatprep.subr.bf16.mxu0 %v922
    %1486 = vmatpush1.bf16.msra.mxu0 %v921
    %1487 = vmatprep.subr.bf16.mxu0 %v926
    %1488 = vmatpush1.bf16.msra.mxu0 %v925
    %1489 = vmatprep.subr.bf16.mxu0 %v930
    %1490 = vmatpush1.bf16.msra.mxu0 %v929
    %1491 = vmatprep.subr.bf16.mxu0 %v934
    %1492 = vmatpush1.bf16.msra.mxu0 %v933
    %1493 = vmatprep.subr.bf16.mxu0 %v938
    %1494 = vmatpush1.bf16.msra.mxu0 %v937
    %1495 = vmatprep.subr.bf16.mxu0 %v942
    %1496 = vmatpush1.bf16.msra.mxu0 %v941
    %1497 = vmatprep.subr.bf16.mxu0 %v946
    %1498 = vmatpush1.bf16.msra.mxu0 %v945
    %1499 = vmatprep.subr.bf16.mxu0 %v950
    %1500 = vmatpush1.bf16.msra.mxu0 %v949
    %1501 = vmatprep.subr.bf16.mxu0 %v954
    %1502 = vmatpush1.bf16.msra.mxu0 %v953
    %1503 = vmatprep.subr.bf16.mxu0 %v958
    %1504 = vmatpush1.bf16.msra.mxu0 %v957
    %1505 = vmatprep.subr.bf16.mxu0 %v962
    %1506 = vmatpush1.bf16.msra.mxu0 %v961
    %1507 = vmatprep.subr.bf16.mxu0 %v966
    %1508 = vmatpush1.bf16.msra.mxu0 %v965
    %1509 = vmatprep.subr.bf16.mxu0 %v970
    %1510 = vmatpush1.bf16.msra.mxu0 %v969
    %1511 = vmatprep.subr.bf16.mxu0 %v974
    %1512 = vmatpush1.bf16.msra.mxu0 %v973
    %1513 = vmatprep.subr.bf16.mxu0 %v978
    %1514 = vmatpush1.bf16.msra.mxu0 %v977
    %1515 = vmatprep.mubr.bf16.mxu0 %v103
    %1516 = vmatmul.mubr.bf16.gmra.mrb[0].mxu0 %v102
    %v1517 = vpop.f32.mrb[0].mxu0
    %v1518 = vadd.f32 %v318, %v1517
    %v1519 = vpop.f32.mrb[0].mxu0
    %v1520 = vadd.f32 %v322, %v1519
    %v1521 = vpop.f32.mrb[0].mxu0
    %v1522 = vadd.f32 %v318, %v1521
    %v1523 = vpop.f32.mrb[0].mxu0
    %v1524 = vadd.f32 %v322, %v1523
    %1525 = vdwg.mxu0
    %1526 = vmatprep.subr.bf16.mxu0 %v982
    %1527 = vmatpush1.bf16.msra.mxu0 %v981
    %1528 = vmatprep.subr.bf16.mxu0 %v986
    %1529 = vmatpush1.bf16.msra.mxu0 %v985
    %1530 = vmatprep.subr.bf16.mxu0 %v990
    %1531 = vmatpush1.bf16.msra.mxu0 %v989
    %1532 = vmatprep.subr.bf16.mxu0 %v994
    %1533 = vmatpush1.bf16.msra.mxu0 %v993
    %1534 = vmatprep.subr.bf16.mxu0 %v998
    %1535 = vmatpush1.bf16.msra.mxu0 %v997
    %1536 = vmatprep.subr.bf16.mxu0 %v1002
    %1537 = vmatpush1.bf16.msra.mxu0 %v1001
    %1538 = vmatprep.subr.bf16.mxu0 %v1006
    %1539 = vmatpush1.bf16.msra.mxu0 %v1005
    %1540 = vmatprep.subr.bf16.mxu0 %v1010
    %1541 = vmatpush1.bf16.msra.mxu0 %v1009
    %1542 = vmatprep.subr.bf16.mxu0 %v1014
    %1543 = vmatpush1.bf16.msra.mxu0 %v1013
    %1544 = vmatprep.subr.bf16.mxu0 %v1018
    %1545 = vmatpush1.bf16.msra.mxu0 %v1017
    %1546 = vmatprep.subr.bf16.mxu0 %v1022
    %1547 = vmatpush1.bf16.msra.mxu0 %v1021
    %1548 = vmatprep.subr.bf16.mxu0 %v1026
    %1549 = vmatpush1.bf16.msra.mxu0 %v1025
    %1550 = vmatprep.subr.bf16.mxu0 %v1030
    %1551 = vmatpush1.bf16.msra.mxu0 %v1029
    %1552 = vmatprep.subr.bf16.mxu0 %v1034
    %1553 = vmatpush1.bf16.msra.mxu0 %v1033
    %1554 = vmatprep.subr.bf16.mxu0 %v1038
    %1555 = vmatpush1.bf16.msra.mxu0 %v1037
    %1556 = vmatprep.subr.bf16.mxu0 %v1042
    %1557 = vmatpush1.bf16.msra.mxu0 %v1041
    %1558 = vmatprep.mubr.bf16.mxu0 %v105
    %1559 = vmatmul.mubr.bf16.gmra.mrb[0].mxu0 %v104
    %v1560 = vpop.f32.mrb[0].mxu0
    %v1561 = vadd.f32 %v1518, %v1560
    %v1562 = vpop.f32.mrb[0].mxu0
    %v1563 = vadd.f32 %v1520, %v1562
    %v1564 = vpop.f32.mrb[0].mxu0
    %v1565 = vadd.f32 %v1522, %v1564
    %v1566 = vpop.f32.mrb[0].mxu0
    %v1567 = vadd.f32 %v1524, %v1566
    %1568 = vdwg.mxu0
    %1569 = vmatprep.subr.bf16.mxu0 %v1046
    %1570 = vmatpush1.bf16.msra.mxu0 %v1045
    %1571 = vmatprep.subr.bf16.mxu0 %v1050
    %1572 = vmatpush1.bf16.msra.mxu0 %v1049
    %1573 = vmatprep.subr.bf16.mxu0 %v1054
    %1574 = vmatpush1.bf16.msra.mxu0 %v1053
    %1575 = vmatprep.subr.bf16.mxu0 %v1058
    %1576 = vmatpush1.bf16.msra.mxu0 %v1057
    %1577 = vmatprep.subr.bf16.mxu0 %v1062
    %1578 = vmatpush1.bf16.msra.mxu0 %v1061
    %1579 = vmatprep.subr.bf16.mxu0 %v1066
    %1580 = vmatpush1.bf16.msra.mxu0 %v1065
    %1581 = vmatprep.subr.bf16.mxu0 %v1070
    %1582 = vmatpush1.bf16.msra.mxu0 %v1069
    %1583 = vmatprep.subr.bf16.mxu0 %v1074
    %1584 = vmatpush1.bf16.msra.mxu0 %v1073
    %1585 = vmatprep.subr.bf16.mxu0 %v1078
    %1586 = vmatpush1.bf16.msra.mxu0 %v1077
    %1587 = vmatprep.subr.bf16.mxu0 %v1082
    %1588 = vmatpush1.bf16.msra.mxu0 %v1081
    %1589 = vmatprep.subr.bf16.mxu0 %v1086
    %1590 = vmatpush1.bf16.msra.mxu0 %v1085
    %1591 = vmatprep.subr.bf16.mxu0 %v1090
    %1592 = vmatpush1.bf16.msra.mxu0 %v1089
    %1593 = vmatprep.subr.bf16.mxu0 %v1094
    %1594 = vmatpush1.bf16.msra.mxu0 %v1093
    %1595 = vmatprep.subr.bf16.mxu0 %v1098
    %1596 = vmatpush1.bf16.msra.mxu0 %v1097
    %1597 = vmatprep.subr.bf16.mxu0 %v1102
    %1598 = vmatpush1.bf16.msra.mxu0 %v1101
    %1599 = vmatprep.subr.bf16.mxu0 %v1106
    %1600 = vmatpush1.bf16.msra.mxu0 %v1105
    %1601 = vmatprep.mubr.bf16.mxu0 %v107
    %1602 = vmatmul.mubr.bf16.gmra.mrb[0].mxu0 %v106
    %v1603 = vpop.f32.mrb[0].mxu0
    %v1604 = vadd.f32 %v1561, %v1603
    %v1605 = vpop.f32.mrb[0].mxu0
    %v1606 = vadd.f32 %v1563, %v1605
    %v1607 = vpop.f32.mrb[0].mxu0
    %v1608 = vadd.f32 %v1565, %v1607
    %v1609 = vpop.f32.mrb[0].mxu0
    %v1610 = vadd.f32 %v1567, %v1609
    %1611 = vdwg.mxu0
    %1612 = vmatprep.subr.bf16.mxu0 %v1110
    %1613 = vmatpush1.bf16.msra.mxu0 %v1109
    %1614 = vmatprep.subr.bf16.mxu0 0
    %1615 = vmatpush1.bf16.msra.mxu0 0
    %1616 = vmatprep.subr.bf16.mxu0 0
    %1617 = vmatpush1.bf16.msra.mxu0 0
    %1618 = vmatprep.subr.bf16.mxu0 0
    %1619 = vmatpush1.bf16.msra.mxu0 0
    %1620 = vmatprep.subr.bf16.mxu0 0
    %1621 = vmatpush1.bf16.msra.mxu0 0
    %1622 = vmatprep.subr.bf16.mxu0 0
    %1623 = vmatpush1.bf16.msra.mxu0 0
    %1624 = vmatprep.subr.bf16.mxu0 0
    %1625 = vmatpush1.bf16.msra.mxu0 0
    %1626 = vmatprep.subr.bf16.mxu0 0
    %1627 = vmatpush1.bf16.msra.mxu0 0
    %1628 = vmatprep.subr.bf16.mxu0 0
    %1629 = vmatpush1.bf16.msra.mxu0 0
    %1630 = vmatprep.subr.bf16.mxu0 0
    %1631 = vmatpush1.bf16.msra.mxu0 0
    %1632 = vmatprep.subr.bf16.mxu0 0
    %1633 = vmatpush1.bf16.msra.mxu0 0
    %1634 = vmatprep.subr.bf16.mxu0 0
    %1635 = vmatpush1.bf16.msra.mxu0 0
    %1636 = vmatprep.subr.bf16.mxu0 0
    %1637 = vmatpush1.bf16.msra.mxu0 0
    %1638 = vmatprep.subr.bf16.mxu0 0
    %1639 = vmatpush1.bf16.msra.mxu0 0
    %1640 = vmatprep.subr.bf16.mxu0 0
    %1641 = vmatpush1.bf16.msra.mxu0 0
    %1642 = vmatprep.subr.bf16.mxu0 0
    %1643 = vmatpush1.bf16.msra.mxu0 0
    %1644 = vmatprep.mubr.bf16.mxu0 0
    %1645 = vmatmul.mubr.bf16.gmra.mrb[0].mxu0 %v1309
    %v1646 = vpop.f32.mrb[0].mxu0
    %v1647 = vadd.f32 %v1604, %v1646
    %v1648 = vpop.f32.mrb[0].mxu0
    %v1649 = vadd.f32 %v1606, %v1648
    %v1650 = vpop.f32.mrb[0].mxu0
    %v1651 = vadd.f32 %v1608, %v1650
    %v1652 = vpop.f32.mrb[0].mxu0
    %v1653 = vadd.f32 %v1610, %v1652
    %1654 = vdwg.mxu0
    %v1655 = vmul.f32 %v1475, 0.5
    %v1656 = vmul.f32 %v1477, 0.5
    %v1657 = vmul.f32 %v1647, 0.5
    %v1658 = vmul.f32 %v1649, 0.5
    %v1659 = vmul.f32 %v1479, 0.5
    %v1660 = vmul.f32 %v1481, 0.5
    %v1661 = vmul.f32 %v1651, 0.5
    %v1662 = vmul.f32 %v1653, 0.5
    %v1663 = vmul.f32 %v1475, 0.70710677
    %v1664 = vmul.f32 %v1477, 0.70710677
    %v1665 = vmul.f32 %v1647, 0.70710677
    %v1666 = vmul.f32 %v1649, 0.70710677
    %v1667 = vmul.f32 %v1479, 0.70710677
    %v1668 = vmul.f32 %v1481, 0.70710677
    %v1669 = vmul.f32 %v1651, 0.70710677
    %v1670 = vmul.f32 %v1653, 0.70710677
    %v1671 = verf.f32.pop %v1663
    %v1672 = verf.f32.pop %v1664
    %v1673 = verf.f32.pop %v1665
    %v1674 = verf.f32.pop %v1666
    %v1675 = verf.f32.pop %v1667
    %v1676 = verf.f32.pop %v1668
    %v1677 = verf.f32.pop %v1669
    %v1678 = verf.f32.pop %v1670
    %v1679 = vadd.f32 %v1671, 1.0
    %v1680 = vadd.f32 %v1672, 1.0
    %v1681 = vadd.f32 %v1673, 1.0
    %v1682 = vadd.f32 %v1674, 1.0
    %v1683 = vadd.f32 %v1675, 1.0
    %v1684 = vadd.f32 %v1676, 1.0
    %v1685 = vadd.f32 %v1677, 1.0
    %v1686 = vadd.f32 %v1678, 1.0
    %v1687 = vmul.f32 %v1655, %v1679
    %v1688 = vmul.f32 %v1656, %v1680
    %v1689 = vmul.f32 %v1657, %v1681
    %v1690 = vmul.f32 %v1658, %v1682
    %v1691 = vmul.f32 %v1659, %v1683
    %v1692 = vmul.f32 %v1660, %v1684
    %v1693 = vmul.f32 %v1661, %v1685
    %v1694 = vmul.f32 %v1662, %v1686
    %v1695 = vpack.c.bf16 %v1691, %v1687
    %v1696 = vpack.c.bf16 %v1692, %v1688
    %v1697 = vpack.c.bf16 %v1693, %v1689
    %v1698 = vpack.c.bf16 %v1694, %v1690
    %v1699 = vld [vmem:[#allocation7] sm:$0xff]
    %v1700 = vld [vmem:[#allocation7 + $0x8] sm:$0xff]
    %v1701 = vld [vmem:[#allocation7 + $0x10] sm:$0xff]
    %v1702 = vld [vmem:[#allocation7 + $0x18] sm:$0xff]
    %v1703 = vld [vmem:[#allocation7 + $0x20] sm:$0xff]
    %v1704 = vld [vmem:[#allocation7 + $0x28] sm:$0xff]
    %v1705 = vld [vmem:[#allocation7 + $0x30] sm:$0xff]
    %v1706 = vld [vmem:[#allocation7 + $0x38] sm:$0xff]
    %v1707 = vld [vmem:[#allocation7 + $0x40] sm:$0xff]
    %v1708 = vld [vmem:[#allocation7 + $0x48] sm:$0xff]
    %v1709 = vld [vmem:[#allocation7 + $0x50] sm:$0xff]
    %v1710 = vld [vmem:[#allocation7 + $0x58] sm:$0xff]
    %v1711 = vld [vmem:[#allocation7 + $0x60] sm:$0xff]
    %v1712 = vld [vmem:[#allocation7 + $0x68] sm:$0xff]
    %v1713 = vld [vmem:[#allocation7 + $0x70] sm:$0xff]
    %v1714 = vld [vmem:[#allocation7 + $0x78] sm:$0xff]
    %v1715 = vld [vmem:[#allocation7 + $0x80] sm:$0xff]
    %v1716 = vld [vmem:[#allocation7 + $0x88] sm:$0xff]
    %v1717 = vld [vmem:[#allocation7 + $0x90] sm:$0xff]
    %v1718 = vld [vmem:[#allocation7 + $0x98] sm:$0xff]
    %v1719 = vld [vmem:[#allocation7 + $0xa0] sm:$0xff]
    %v1720 = vld [vmem:[#allocation7 + $0xa8] sm:$0xff]
    %v1721 = vld [vmem:[#allocation7 + $0xb0] sm:$0xff]
    %v1722 = vld [vmem:[#allocation7 + $0xb8] sm:$0xff]
    %v1723 = vld [vmem:[#allocation7 + $0xc0] sm:$0xff]
    %v1724 = vld [vmem:[#allocation7 + $0xc8] sm:$0xff]
    %v1725 = vld [vmem:[#allocation7 + $0xd0] sm:$0xff]
    %v1726 = vld [vmem:[#allocation7 + $0xd8] sm:$0xff]
    %v1727 = vld [vmem:[#allocation7 + $0xe0] sm:$0xff]
    %v1728 = vld [vmem:[#allocation7 + $0xe8] sm:$0xff]
    %v1729 = vld [vmem:[#allocation7 + $0xf0] sm:$0xff]
    %v1730 = vld [vmem:[#allocation7 + $0xf8] sm:$0xff]
    %v1731 = vld [vmem:[#allocation7 + $0x100] sm:$0xff]
    %v1732 = vld [vmem:[#allocation7 + $0x108] sm:$0xff]
    %v1733 = vld [vmem:[#allocation7 + $0x110] sm:$0xff]
    %v1734 = vld [vmem:[#allocation7 + $0x118] sm:$0xff]
    %v1735 = vld [vmem:[#allocation7 + $0x120] sm:$0xff]
    %v1736 = vld [vmem:[#allocation7 + $0x128] sm:$0xff]
    %v1737 = vld [vmem:[#allocation7 + $0x130] sm:$0xff]
    %v1738 = vld [vmem:[#allocation7 + $0x138] sm:$0xff]
    %v1739 = vld [vmem:[#allocation7 + $0x140] sm:$0xff]
    %v1740 = vld [vmem:[#allocation7 + $0x148] sm:$0xff]
    %v1741 = vld [vmem:[#allocation7 + $0x150] sm:$0xff]
    %v1742 = vld [vmem:[#allocation7 + $0x158] sm:$0xff]
    %v1743 = vld [vmem:[#allocation7 + $0x160] sm:$0xff]
    %v1744 = vld [vmem:[#allocation7 + $0x168] sm:$0xff]
    %v1745 = vld [vmem:[#allocation7 + $0x170] sm:$0xff]
    %v1746 = vld [vmem:[#allocation7 + $0x178] sm:$0xff]
    %v1747 = vld [vmem:[#allocation7 + $0x180] sm:$0xff]
    %v1748 = vld [vmem:[#allocation7 + $0x188] sm:$0xff]
    %v1749 = vld [vmem:[#allocation7 + $0x190] sm:$0xff]
    %v1750 = vld [vmem:[#allocation7 + $0x198] sm:$0xff]
    %v1751 = vld [vmem:[#allocation7 + $0x1a0] sm:$0xff]
    %v1752 = vld [vmem:[#allocation7 + $0x1a8] sm:$0xff]
    %v1753 = vld [vmem:[#allocation7 + $0x1b0] sm:$0xff]
    %v1754 = vld [vmem:[#allocation7 + $0x1b8] sm:$0xff]
    %v1755 = vld [vmem:[#allocation7 + $0x1c0] sm:$0xff]
    %v1756 = vld [vmem:[#allocation7 + $0x1c8] sm:$0xff]
    %v1757 = vld [vmem:[#allocation7 + $0x1d0] sm:$0xff]
    %v1758 = vld [vmem:[#allocation7 + $0x1d8] sm:$0xff]
    %v1759 = vld [vmem:[#allocation7 + $0x1e0] sm:$0xff]
    %v1760 = vld [vmem:[#allocation7 + $0x1e8] sm:$0xff]
    %v1761 = vld [vmem:[#allocation7 + $0x1f0] sm:$0xff]
    %v1762 = vld [vmem:[#allocation7 + $0x1f8] sm:$0xff]
    %v1763 = vld [vmem:[%s4] sm:$0x3]
    %v1765 = vlaneseq
    %v1766 = vshrl.u32 %v1765, 7
    %v1767 = vsub.s32 0, %v1766
    %v1768 = vrot.slane %v1763, %v1767
    %v1769 = vlaneseq
    %v1770 = vshrl.u32 %v1769, 7
    %v1771 = vsub.s32 1, %v1770
    %v1772 = vrot.slane %v1763, %v1771
    %v1839 = vunpack.c.l.b16 %v1699
    %v1840 = vunpack.c.h.b16 %v1699
    %v1841 = vunpack.c.l.b16 %v1700
    %v1842 = vunpack.c.h.b16 %v1700
    %v1843 = vunpack.c.l.b16 %v1701
    %v1844 = vunpack.c.h.b16 %v1701
    %v1845 = vunpack.c.l.b16 %v1702
    %v1846 = vunpack.c.h.b16 %v1702
    %v1847 = vunpack.c.l.b16 %v1703
    %v1848 = vunpack.c.h.b16 %v1703
    %v1849 = vunpack.c.l.b16 %v1704
    %v1850 = vunpack.c.h.b16 %v1704
    %v1851 = vunpack.c.l.b16 %v1705
    %v1852 = vunpack.c.h.b16 %v1705
    %v1853 = vunpack.c.l.b16 %v1706
    %v1854 = vunpack.c.h.b16 %v1706
    %v1855 = vunpack.c.l.b16 %v1707
    %v1856 = vunpack.c.h.b16 %v1707
    %v1857 = vunpack.c.l.b16 %v1708
    %v1858 = vunpack.c.h.b16 %v1708
    %v1859 = vunpack.c.l.b16 %v1709
    %v1860 = vunpack.c.h.b16 %v1709
    %v1861 = vunpack.c.l.b16 %v1710
    %v1862 = vunpack.c.h.b16 %v1710
    %v1863 = vunpack.c.l.b16 %v1711
    %v1864 = vunpack.c.h.b16 %v1711
    %v1865 = vunpack.c.l.b16 %v1712
    %v1866 = vunpack.c.h.b16 %v1712
    %v1867 = vunpack.c.l.b16 %v1713
    %v1868 = vunpack.c.h.b16 %v1713
    %v1869 = vunpack.c.l.b16 %v1714
    %v1870 = vunpack.c.h.b16 %v1714
    %v1871 = vunpack.c.l.b16 %v1715
    %v1872 = vunpack.c.h.b16 %v1715
    %v1873 = vunpack.c.l.b16 %v1716
    %v1874 = vunpack.c.h.b16 %v1716
    %v1875 = vunpack.c.l.b16 %v1717
    %v1876 = vunpack.c.h.b16 %v1717
    %v1877 = vunpack.c.l.b16 %v1718
    %v1878 = vunpack.c.h.b16 %v1718
    %v1879 = vunpack.c.l.b16 %v1719
    %v1880 = vunpack.c.h.b16 %v1719
    %v1881 = vunpack.c.l.b16 %v1720
    %v1882 = vunpack.c.h.b16 %v1720
    %v1883 = vunpack.c.l.b16 %v1721
    %v1884 = vunpack.c.h.b16 %v1721
    %v1885 = vunpack.c.l.b16 %v1722
    %v1886 = vunpack.c.h.b16 %v1722
    %v1887 = vunpack.c.l.b16 %v1723
    %v1888 = vunpack.c.h.b16 %v1723
    %v1889 = vunpack.c.l.b16 %v1724
    %v1890 = vunpack.c.h.b16 %v1724
    %v1891 = vunpack.c.l.b16 %v1725
    %v1892 = vunpack.c.h.b16 %v1725
    %v1893 = vunpack.c.l.b16 %v1726
    %v1894 = vunpack.c.h.b16 %v1726
    %v1895 = vunpack.c.l.b16 %v1727
    %v1896 = vunpack.c.h.b16 %v1727
    %v1897 = vunpack.c.l.b16 %v1728
    %v1898 = vunpack.c.h.b16 %v1728
    %v1899 = vunpack.c.l.b16 %v1729
    %v1900 = vunpack.c.h.b16 %v1729
    %v1901 = vunpack.c.l.b16 %v1730
    %v1902 = vunpack.c.h.b16 %v1730
    %v1903 = vunpack.c.l.b16 %v1731
    %v1904 = vunpack.c.h.b16 %v1731
    %v1905 = vunpack.c.l.b16 %v1732
    %v1906 = vunpack.c.h.b16 %v1732
    %v1907 = vunpack.c.l.b16 %v1733
    %v1908 = vunpack.c.h.b16 %v1733
    %v1909 = vunpack.c.l.b16 %v1734
    %v1910 = vunpack.c.h.b16 %v1734
    %v1911 = vunpack.c.l.b16 %v1735
    %v1912 = vunpack.c.h.b16 %v1735
    %v1913 = vunpack.c.l.b16 %v1736
    %v1914 = vunpack.c.h.b16 %v1736
    %v1915 = vunpack.c.l.b16 %v1737
    %v1916 = vunpack.c.h.b16 %v1737
    %v1917 = vunpack.c.l.b16 %v1738
    %v1918 = vunpack.c.h.b16 %v1738
    %v1919 = vunpack.c.l.b16 %v1739
    %v1920 = vunpack.c.h.b16 %v1739
    %v1921 = vunpack.c.l.b16 %v1740
    %v1922 = vunpack.c.h.b16 %v1740
    %v1923 = vunpack.c.l.b16 %v1741
    %v1924 = vunpack.c.h.b16 %v1741
    %v1925 = vunpack.c.l.b16 %v1742
    %v1926 = vunpack.c.h.b16 %v1742
    %v1927 = vunpack.c.l.b16 %v1743
    %v1928 = vunpack.c.h.b16 %v1743
    %v1929 = vunpack.c.l.b16 %v1744
    %v1930 = vunpack.c.h.b16 %v1744
    %v1931 = vunpack.c.l.b16 %v1745
    %v1932 = vunpack.c.h.b16 %v1745
    %v1933 = vunpack.c.l.b16 %v1746
    %v1934 = vunpack.c.h.b16 %v1746
    %v1935 = vunpack.c.l.b16 %v1747
    %v1936 = vunpack.c.h.b16 %v1747
    %v1937 = vunpack.c.l.b16 %v1748
    %v1938 = vunpack.c.h.b16 %v1748
    %v1939 = vunpack.c.l.b16 %v1749
    %v1940 = vunpack.c.h.b16 %v1749
    %v1941 = vunpack.c.l.b16 %v1750
    %v1942 = vunpack.c.h.b16 %v1750
    %v1943 = vunpack.c.l.b16 %v1751
    %v1944 = vunpack.c.h.b16 %v1751
    %v1945 = vunpack.c.l.b16 %v1752
    %v1946 = vunpack.c.h.b16 %v1752
    %v1947 = vunpack.c.l.b16 %v1753
    %v1948 = vunpack.c.h.b16 %v1753
    %v1949 = vunpack.c.l.b16 %v1754
    %v1950 = vunpack.c.h.b16 %v1754
    %v1951 = vunpack.c.l.b16 %v1755
    %v1952 = vunpack.c.h.b16 %v1755
    %v1953 = vunpack.c.l.b16 %v1756
    %v1954 = vunpack.c.h.b16 %v1756
    %v1955 = vunpack.c.l.b16 %v1757
    %v1956 = vunpack.c.h.b16 %v1757
    %v1957 = vunpack.c.l.b16 %v1758
    %v1958 = vunpack.c.h.b16 %v1758
    %v1959 = vunpack.c.l.b16 %v1759
    %v1960 = vunpack.c.h.b16 %v1759
    %v1961 = vunpack.c.l.b16 %v1760
    %v1962 = vunpack.c.h.b16 %v1760
    %v1963 = vunpack.c.l.b16 %v1761
    %v1964 = vunpack.c.h.b16 %v1761
    %v1965 = vunpack.c.l.b16 %v1762
    %v1966 = vunpack.c.h.b16 %v1762
    %v1967 = vpack.c.b16 %v1841, %v1839
    %v1968 = vpack.c.b16 %v1842, %v1840
    %v1969 = vpack.c.b16 %v1845, %v1843
    %v1970 = vpack.c.b16 %v1846, %v1844
    %v1971 = vpack.c.b16 %v1849, %v1847
    %v1972 = vpack.c.b16 %v1850, %v1848
    %v1973 = vpack.c.b16 %v1853, %v1851
    %v1974 = vpack.c.b16 %v1854, %v1852
    %v1975 = vpack.c.b16 %v1857, %v1855
    %v1976 = vpack.c.b16 %v1858, %v1856
    %v1977 = vpack.c.b16 %v1861, %v1859
    %v1978 = vpack.c.b16 %v1862, %v1860
    %v1979 = vpack.c.b16 %v1865, %v1863
    %v1980 = vpack.c.b16 %v1866, %v1864
    %v1981 = vpack.c.b16 %v1869, %v1867
    %v1982 = vpack.c.b16 %v1870, %v1868
    %v1983 = vpack.c.b16 %v1873, %v1871
    %v1984 = vpack.c.b16 %v1874, %v1872
    %v1985 = vpack.c.b16 %v1877, %v1875
    %v1986 = vpack.c.b16 %v1878, %v1876
    %v1987 = vpack.c.b16 %v1881, %v1879
    %v1988 = vpack.c.b16 %v1882, %v1880
    %v1989 = vpack.c.b16 %v1885, %v1883
    %v1990 = vpack.c.b16 %v1886, %v1884
    %v1991 = vpack.c.b16 %v1889, %v1887
    %v1992 = vpack.c.b16 %v1890, %v1888
    %v1993 = vpack.c.b16 %v1893, %v1891
    %v1994 = vpack.c.b16 %v1894, %v1892
    %v1995 = vpack.c.b16 %v1897, %v1895
    %v1996 = vpack.c.b16 %v1898, %v1896
    %v1997 = vpack.c.b16 %v1901, %v1899
    %v1998 = vpack.c.b16 %v1902, %v1900
    %v1999 = vpack.c.b16 %v1905, %v1903
    %v2000 = vpack.c.b16 %v1906, %v1904
    %v2001 = vpack.c.b16 %v1909, %v1907
    %v2002 = vpack.c.b16 %v1910, %v1908
    %v2003 = vpack.c.b16 %v1913, %v1911
    %v2004 = vpack.c.b16 %v1914, %v1912
    %v2005 = vpack.c.b16 %v1917, %v1915
    %v2006 = vpack.c.b16 %v1918, %v1916
    %v2007 = vpack.c.b16 %v1921, %v1919
    %v2008 = vpack.c.b16 %v1922, %v1920
    %v2009 = vpack.c.b16 %v1925, %v1923
    %v2010 = vpack.c.b16 %v1926, %v1924
    %v2011 = vpack.c.b16 %v1929, %v1927
    %v2012 = vpack.c.b16 %v1930, %v1928
    %v2013 = vpack.c.b16 %v1933, %v1931
    %v2014 = vpack.c.b16 %v1934, %v1932
    %v2015 = vpack.c.b16 %v1937, %v1935
    %v2016 = vpack.c.b16 %v1938, %v1936
    %v2017 = vpack.c.b16 %v1941, %v1939
    %v2018 = vpack.c.b16 %v1942, %v1940
    %v2019 = vpack.c.b16 %v1945, %v1943
    %v2020 = vpack.c.b16 %v1946, %v1944
    %v2021 = vpack.c.b16 %v1949, %v1947
    %v2022 = vpack.c.b16 %v1950, %v1948
    %v2023 = vpack.c.b16 %v1953, %v1951
    %v2024 = vpack.c.b16 %v1954, %v1952
    %v2025 = vpack.c.b16 %v1957, %v1955
    %v2026 = vpack.c.b16 %v1958, %v1956
    %v2027 = vpack.c.b16 %v1961, %v1959
    %v2028 = vpack.c.b16 %v1962, %v1960
    %v2029 = vpack.c.b16 %v1965, %v1963
    %v2030 = vpack.c.b16 %v1966, %v1964
    %2095 = vmatprep.subr.bf16.mxu0 %v1968
    %2096 = vmatpush1.bf16.msra.mxu0 %v1967
    %2097 = vmatprep.subr.bf16.mxu0 %v1970
    %2098 = vmatpush1.bf16.msra.mxu0 %v1969
    %2099 = vmatprep.subr.bf16.mxu0 %v1972
    %2100 = vmatpush1.bf16.msra.mxu0 %v1971
    %2101 = vmatprep.subr.bf16.mxu0 %v1974
    %2102 = vmatpush1.bf16.msra.mxu0 %v1973
    %2103 = vmatprep.subr.bf16.mxu0 %v1976
    %2104 = vmatpush1.bf16.msra.mxu0 %v1975
    %2105 = vmatprep.subr.bf16.mxu0 %v1978
    %2106 = vmatpush1.bf16.msra.mxu0 %v1977
    %2107 = vmatprep.subr.bf16.mxu0 %v1980
    %2108 = vmatpush1.bf16.msra.mxu0 %v1979
    %2109 = vmatprep.subr.bf16.mxu0 %v1982
    %2110 = vmatpush1.bf16.msra.mxu0 %v1981
    %2111 = vmatprep.subr.bf16.mxu0 %v1984
    %2112 = vmatpush1.bf16.msra.mxu0 %v1983
    %2113 = vmatprep.subr.bf16.mxu0 %v1986
    %2114 = vmatpush1.bf16.msra.mxu0 %v1985
    %2115 = vmatprep.subr.bf16.mxu0 %v1988
    %2116 = vmatpush1.bf16.msra.mxu0 %v1987
    %2117 = vmatprep.subr.bf16.mxu0 %v1990
    %2118 = vmatpush1.bf16.msra.mxu0 %v1989
    %2119 = vmatprep.subr.bf16.mxu0 %v1992
    %2120 = vmatpush1.bf16.msra.mxu0 %v1991
    %2121 = vmatprep.subr.bf16.mxu0 %v1994
    %2122 = vmatpush1.bf16.msra.mxu0 %v1993
    %2123 = vmatprep.subr.bf16.mxu0 %v1996
    %2124 = vmatpush1.bf16.msra.mxu0 %v1995
    %2125 = vmatprep.subr.bf16.mxu0 %v1998
    %2126 = vmatpush1.bf16.msra.mxu0 %v1997
    %2127 = vmatprep.mubr.bf16.mxu0 %v1696
    %2128 = vmatmul.mubr.bf16.gmra.mrb[0].mxu0 %v1695
    %v2129 = vpop.f32.mrb[0].mxu0
    %v2130 = vadd.f32 %v1768, %v2129
    %v2131 = vpop.f32.mrb[0].mxu0
    %v2132 = vadd.f32 %v1772, %v2131
    %v2133 = vpop.f32.mrb[0].mxu0
    %v2134 = vadd.f32 %v1768, %v2133
    %v2135 = vpop.f32.mrb[0].mxu0
    %v2136 = vadd.f32 %v1772, %v2135
    %2137 = vdwg.mxu0
    %2138 = vmatprep.subr.bf16.mxu0 %v2000
    %2139 = vmatpush1.bf16.msra.mxu0 %v1999
    %2140 = vmatprep.subr.bf16.mxu0 %v2002
    %2141 = vmatpush1.bf16.msra.mxu0 %v2001
    %2142 = vmatprep.subr.bf16.mxu0 %v2004
    %2143 = vmatpush1.bf16.msra.mxu0 %v2003
    %2144 = vmatprep.subr.bf16.mxu0 %v2006
    %2145 = vmatpush1.bf16.msra.mxu0 %v2005
    %2146 = vmatprep.subr.bf16.mxu0 %v2008
    %2147 = vmatpush1.bf16.msra.mxu0 %v2007
    %2148 = vmatprep.subr.bf16.mxu0 %v2010
    %2149 = vmatpush1.bf16.msra.mxu0 %v2009
    %2150 = vmatprep.subr.bf16.mxu0 %v2012
    %2151 = vmatpush1.bf16.msra.mxu0 %v2011
    %2152 = vmatprep.subr.bf16.mxu0 %v2014
    %2153 = vmatpush1.bf16.msra.mxu0 %v2013
    %2154 = vmatprep.subr.bf16.mxu0 %v2016
    %2155 = vmatpush1.bf16.msra.mxu0 %v2015
    %2156 = vmatprep.subr.bf16.mxu0 %v2018
    %2157 = vmatpush1.bf16.msra.mxu0 %v2017
    %2158 = vmatprep.subr.bf16.mxu0 %v2020
    %2159 = vmatpush1.bf16.msra.mxu0 %v2019
    %2160 = vmatprep.subr.bf16.mxu0 %v2022
    %2161 = vmatpush1.bf16.msra.mxu0 %v2021
    %2162 = vmatprep.subr.bf16.mxu0 %v2024
    %2163 = vmatpush1.bf16.msra.mxu0 %v2023
    %2164 = vmatprep.subr.bf16.mxu0 %v2026
    %2165 = vmatpush1.bf16.msra.mxu0 %v2025
    %2166 = vmatprep.subr.bf16.mxu0 %v2028
    %2167 = vmatpush1.bf16.msra.mxu0 %v2027
    %2168 = vmatprep.subr.bf16.mxu0 %v2030
    %2169 = vmatpush1.bf16.msra.mxu0 %v2029
    %2170 = vmatprep.mubr.bf16.mxu0 %v1698
    %2171 = vmatmul.mubr.bf16.gmra.mrb[0].mxu0 %v1697
    %v2172 = vpop.f32.mrb[0].mxu0
    %v2173 = vadd.f32 %v2130, %v2172
    %v2174 = vpop.f32.mrb[0].mxu0
    %v2175 = vadd.f32 %v2132, %v2174
    %v2176 = vpop.f32.mrb[0].mxu0
    %v2177 = vadd.f32 %v2134, %v2176
    %v2178 = vpop.f32.mrb[0].mxu0
    %v2179 = vadd.f32 %v2136, %v2178
    %2180 = vdwg.mxu0
    %v2181 = vmul.f32 %v2173, 0.5
    %v2182 = vmul.f32 %v2175, 0.5
    %v2183 = vmul.f32 %v2177, 0.5
    %v2184 = vmul.f32 %v2179, 0.5
    %v2185 = vmul.f32 %v2173, 0.70710677
    %v2186 = vmul.f32 %v2175, 0.70710677
    %v2187 = vmul.f32 %v2177, 0.70710677
    %v2188 = vmul.f32 %v2179, 0.70710677
    %v2189 = verf.f32.pop %v2185
    %v2190 = verf.f32.pop %v2186
    %v2191 = verf.f32.pop %v2187
    %v2192 = verf.f32.pop %v2188
    %v2193 = vadd.f32 %v2189, 1.0
    %v2194 = vadd.f32 %v2190, 1.0
    %v2195 = vadd.f32 %v2191, 1.0
    %v2196 = vadd.f32 %v2192, 1.0
    %v2197 = vmul.f32 %v2181, %v2193
    %v2198 = vmul.f32 %v2182, %v2194
    %v2199 = vmul.f32 %v2183, %v2195
    %v2200 = vmul.f32 %v2184, %v2196
    %v2201 = vpack.c.bf16 %v2199, %v2197
    %v2202 = vpack.c.bf16 %v2200, %v2198
    %v2203 = vld [vmem:[%s5] sm:$0xf]
    %v2204 = vld [vmem:[%s5 + $0x4] sm:$0xf]
    %v2205 = vld [vmem:[%s5 + $0x8] sm:$0xf]
    %v2206 = vld [vmem:[%s5 + $0xc] sm:$0xf]
    %v2207 = vld [vmem:[%s5 + $0x10] sm:$0xf]
    %v2208 = vld [vmem:[%s5 + $0x14] sm:$0xf]
    %v2209 = vld [vmem:[%s5 + $0x18] sm:$0xf]
    %v2210 = vld [vmem:[%s5 + $0x1c] sm:$0xf]
    %v2211 = vld [vmem:[%s5 + $0x20] sm:$0xf]
    %v2212 = vld [vmem:[%s5 + $0x24] sm:$0xf]
    %v2213 = vld [vmem:[%s5 + $0x28] sm:$0xf]
    %v2214 = vld [vmem:[%s5 + $0x2c] sm:$0xf]
    %v2215 = vld [vmem:[%s5 + $0x30] sm:$0xf]
    %v2216 = vld [vmem:[%s5 + $0x34] sm:$0xf]
    %v2217 = vld [vmem:[%s5 + $0x38] sm:$0xf]
    %v2218 = vld [vmem:[%s5 + $0x3c] sm:$0xf]
    %v2219 = vld [vmem:[%s5 + $0x40] sm:$0xf]
    %v2220 = vld [vmem:[%s5 + $0x44] sm:$0xf]
    %v2221 = vld [vmem:[%s5 + $0x48] sm:$0xf]
    %v2222 = vld [vmem:[%s5 + $0x4c] sm:$0xf]
    %v2223 = vld [vmem:[%s5 + $0x50] sm:$0xf]
    %v2224 = vld [vmem:[%s5 + $0x54] sm:$0xf]
    %v2225 = vld [vmem:[%s5 + $0x58] sm:$0xf]
    %v2226 = vld [vmem:[%s5 + $0x5c] sm:$0xf]
    %v2227 = vld [vmem:[%s5 + $0x60] sm:$0xf]
    %v2228 = vld [vmem:[%s5 + $0x64] sm:$0xf]
    %v2229 = vld [vmem:[%s5 + $0x68] sm:$0xf]
    %v2230 = vld [vmem:[%s5 + $0x6c] sm:$0xf]
    %v2231 = vld [vmem:[%s5 + $0x70] sm:$0xf]
    %v2232 = vld [vmem:[%s5 + $0x74] sm:$0xf]
    %v2233 = vld [vmem:[%s5 + $0x78] sm:$0xf]
    %v2234 = vld [vmem:[%s5 + $0x7c] sm:$0xf]
    %v2235 = vld [vmem:[%s6] sm:$0x1]
    %v2237 = vlaneseq
    %v2238 = vshrl.u32 %v2237, 7
    %v2239 = vsub.s32 0, %v2238
    %v2240 = vrot.slane %v2235, %v2239
    %v2274 = vunpack.c.l.b16 %v2203
    %v2275 = vunpack.c.l.b16 %v2204
    %v2276 = vunpack.c.l.b16 %v2205
    %v2277 = vunpack.c.l.b16 %v2206
    %v2278 = vunpack.c.l.b16 %v2207
    %v2279 = vunpack.c.l.b16 %v2208
    %v2280 = vunpack.c.l.b16 %v2209
    %v2281 = vunpack.c.l.b16 %v2210
    %v2282 = vunpack.c.l.b16 %v2211
    %v2283 = vunpack.c.l.b16 %v2212
    %v2284 = vunpack.c.l.b16 %v2213
    %v2285 = vunpack.c.l.b16 %v2214
    %v2286 = vunpack.c.l.b16 %v2215
    %v2287 = vunpack.c.l.b16 %v2216
    %v2288 = vunpack.c.l.b16 %v2217
    %v2289 = vunpack.c.l.b16 %v2218
    %v2290 = vunpack.c.l.b16 %v2219
    %v2291 = vunpack.c.l.b16 %v2220
    %v2292 = vunpack.c.l.b16 %v2221
    %v2293 = vunpack.c.l.b16 %v2222
    %v2294 = vunpack.c.l.b16 %v2223
    %v2295 = vunpack.c.l.b16 %v2224
    %v2296 = vunpack.c.l.b16 %v2225
    %v2297 = vunpack.c.l.b16 %v2226
    %v2298 = vunpack.c.l.b16 %v2227
    %v2299 = vunpack.c.l.b16 %v2228
    %v2300 = vunpack.c.l.b16 %v2229
    %v2301 = vunpack.c.l.b16 %v2230
    %v2302 = vunpack.c.l.b16 %v2231
    %v2303 = vunpack.c.l.b16 %v2232
    %v2304 = vunpack.c.l.b16 %v2233
    %v2305 = vunpack.c.l.b16 %v2234
    %v2306 = vpack.c.b16 %v2275, %v2274
    %v2307 = vpack.c.b16 %v2277, %v2276
    %v2308 = vpack.c.b16 %v2279, %v2278
    %v2309 = vpack.c.b16 %v2281, %v2280
    %v2310 = vpack.c.b16 %v2283, %v2282
    %v2311 = vpack.c.b16 %v2285, %v2284
    %v2312 = vpack.c.b16 %v2287, %v2286
    %v2313 = vpack.c.b16 %v2289, %v2288
    %v2314 = vpack.c.b16 %v2291, %v2290
    %v2315 = vpack.c.b16 %v2293, %v2292
    %v2316 = vpack.c.b16 %v2295, %v2294
    %v2317 = vpack.c.b16 %v2297, %v2296
    %v2318 = vpack.c.b16 %v2299, %v2298
    %v2319 = vpack.c.b16 %v2301, %v2300
    %v2320 = vpack.c.b16 %v2303, %v2302
    %v2321 = vpack.c.b16 %v2305, %v2304
    %2338 = vmatprep.subr.bf16.mxu0 0
    %2339 = vmatpush1.bf16.msra.mxu0 %v2306
    %2340 = vmatprep.subr.bf16.mxu0 0
    %2341 = vmatpush1.bf16.msra.mxu0 %v2307
    %2342 = vmatprep.subr.bf16.mxu0 0
    %2343 = vmatpush1.bf16.msra.mxu0 %v2308
    %2344 = vmatprep.subr.bf16.mxu0 0
    %2345 = vmatpush1.bf16.msra.mxu0 %v2309
    %2346 = vmatprep.subr.bf16.mxu0 0
    %2347 = vmatpush1.bf16.msra.mxu0 %v2310
    %2348 = vmatprep.subr.bf16.mxu0 0
    %2349 = vmatpush1.bf16.msra.mxu0 %v2311
    %2350 = vmatprep.subr.bf16.mxu0 0
    %2351 = vmatpush1.bf16.msra.mxu0 %v2312
    %2352 = vmatprep.subr.bf16.mxu0 0
    %2353 = vmatpush1.bf16.msra.mxu0 %v2313
    %2354 = vmatprep.subr.bf16.mxu0 0
    %2355 = vmatpush1.bf16.msra.mxu0 %v2314
    %2356 = vmatprep.subr.bf16.mxu0 0
    %2357 = vmatpush1.bf16.msra.mxu0 %v2315
    %2358 = vmatprep.subr.bf16.mxu0 0
    %2359 = vmatpush1.bf16.msra.mxu0 %v2316
    %2360 = vmatprep.subr.bf16.mxu0 0
    %2361 = vmatpush1.bf16.msra.mxu0 %v2317
    %2362 = vmatprep.subr.bf16.mxu0 0
    %2363 = vmatpush1.bf16.msra.mxu0 %v2318
    %2364 = vmatprep.subr.bf16.mxu0 0
    %2365 = vmatpush1.bf16.msra.mxu0 %v2319
    %2366 = vmatprep.subr.bf16.mxu0 0
    %2367 = vmatpush1.bf16.msra.mxu0 %v2320
    %2368 = vmatprep.subr.bf16.mxu0 0
    %2369 = vmatpush1.bf16.msra.mxu0 %v2321
    %2370 = vmatprep.mubr.bf16.mxu0 %v2202
    %2371 = vmatmul.mubr.bf16.gmra.mrb[0].mxu0 %v2201
    %v2372 = vpop.f32.mrb[0].mxu0
    %v2373 = vadd.f32 %v2240, %v2372
    %v2374 = vpop.f32.mrb[0].mxu0
    %v2375 = vpop.f32.mrb[0].mxu0
    %v2376 = vadd.f32 %v2240, %v2375
    %v2377 = vpop.f32.mrb[0].mxu0
    %2378 = vdwg.mxu0
    %v2379 = vmul.f32 %v2373, 0.5
    %v2380 = vmul.f32 %v2376, 0.5
    %v2381 = vmul.f32 %v2373, 0.70710677
    %v2382 = vmul.f32 %v2376, 0.70710677
    %v2383 = verf.f32.pop %v2381
    %v2384 = verf.f32.pop %v2382
    %v2385 = vadd.f32 %v2383, 1.0
    %v2386 = vadd.f32 %v2384, 1.0
    %v2387 = vmul.f32 %v2379, %v2385
    %v2388 = vmul.f32 %v2380, %v2386
    %v2389 = vpack.c.bf16 %v2388, %v2387
    %v2390 = vld [vmem:[%s7] sm:$0xf]
    %v2391 = vld [vmem:[%s7 + $0x4] sm:$0xf]
    %v2392 = vld [vmem:[%s7 + $0x8] sm:$0xf]
    %v2393 = vld [vmem:[%s7 + $0xc] sm:$0xf]
    %v2394 = vld [vmem:[%s7 + $0x10] sm:$0xf]
    %v2395 = vld [vmem:[%s7 + $0x14] sm:$0xf]
    %v2396 = vld [vmem:[%s7 + $0x18] sm:$0xf]
    %v2397 = vld [vmem:[%s7 + $0x1c] sm:$0xf]
    %v2398 = vld [vmem:[%s7 + $0x20] sm:$0xf]
    %v2399 = vld [vmem:[%s7 + $0x24] sm:$0xf]
    %v2400 = vld [vmem:[%s7 + $0x28] sm:$0xf]
    %v2401 = vld [vmem:[%s7 + $0x2c] sm:$0xf]
    %v2402 = vld [vmem:[%s7 + $0x30] sm:$0xf]
    %v2403 = vld [vmem:[%s7 + $0x34] sm:$0xf]
    %v2404 = vld [vmem:[%s7 + $0x38] sm:$0xf]
    %v2405 = vld [vmem:[%s7 + $0x3c] sm:$0xf]
    %v2406 = vld [vmem:[%s8] sm:$0x1]
    %v2408 = vlaneseq
    %v2409 = vshrl.u32 %v2408, 7
    %v2410 = vsub.s32 0, %v2409
    %v2411 = vrot.slane %v2406, %v2410
    %v2429 = vunpack.c.l.b16 %v2390
    %v2430 = vunpack.c.l.b16 %v2391
    %v2431 = vunpack.c.l.b16 %v2392
    %v2432 = vunpack.c.l.b16 %v2393
    %v2433 = vunpack.c.l.b16 %v2394
    %v2434 = vunpack.c.l.b16 %v2395
    %v2435 = vunpack.c.l.b16 %v2396
    %v2436 = vunpack.c.l.b16 %v2397
    %v2437 = vunpack.c.l.b16 %v2398
    %v2438 = vunpack.c.l.b16 %v2399
    %v2439 = vunpack.c.l.b16 %v2400
    %v2440 = vunpack.c.l.b16 %v2401
    %v2441 = vunpack.c.l.b16 %v2402
    %v2442 = vunpack.c.l.b16 %v2403
    %v2443 = vunpack.c.l.b16 %v2404
    %v2444 = vunpack.c.l.b16 %v2405
    %v2445 = vpack.c.b16 %v2430, %v2429
    %v2446 = vpack.c.b16 %v2432, %v2431
    %v2447 = vpack.c.b16 %v2434, %v2433
    %v2448 = vpack.c.b16 %v2436, %v2435
    %v2449 = vpack.c.b16 %v2438, %v2437
    %v2450 = vpack.c.b16 %v2440, %v2439
    %v2451 = vpack.c.b16 %v2442, %v2441
    %v2452 = vpack.c.b16 %v2444, %v2443
    %2461 = vmatprep.subr.bf16.mxu0 0
    %2462 = vmatpush1.bf16.msra.mxu0 %v2445
    %2463 = vmatprep.subr.bf16.mxu0 0
    %2464 = vmatpush1.bf16.msra.mxu0 %v2446
    %2465 = vmatprep.subr.bf16.mxu0 0
    %2466 = vmatpush1.bf16.msra.mxu0 %v2447
    %2467 = vmatprep.subr.bf16.mxu0 0
    %2468 = vmatpush1.bf16.msra.mxu0 %v2448
    %2469 = vmatprep.subr.bf16.mxu0 0
    %2470 = vmatpush1.bf16.msra.mxu0 %v2449
    %2471 = vmatprep.subr.bf16.mxu0 0
    %2472 = vmatpush1.bf16.msra.mxu0 %v2450
    %2473 = vmatprep.subr.bf16.mxu0 0
    %2474 = vmatpush1.bf16.msra.mxu0 %v2451
    %2475 = vmatprep.subr.bf16.mxu0 0
    %2476 = vmatpush1.bf16.msra.mxu0 %v2452
    %2477 = vmatprep.subr.bf16.mxu0 0
    %2478 = vmatpush1.bf16.msra.mxu0 0
    %2479 = vmatprep.subr.bf16.mxu0 0
    %2480 = vmatpush1.bf16.msra.mxu0 0
    %2481 = vmatprep.subr.bf16.mxu0 0
    %2482 = vmatpush1.bf16.msra.mxu0 0
    %2483 = vmatprep.subr.bf16.mxu0 0
    %2484 = vmatpush1.bf16.msra.mxu0 0
    %2485 = vmatprep.subr.bf16.mxu0 0
    %2486 = vmatpush1.bf16.msra.mxu0 0
    %2487 = vmatprep.subr.bf16.mxu0 0
    %2488 = vmatpush1.bf16.msra.mxu0 0
    %2489 = vmatprep.subr.bf16.mxu0 0
    %2490 = vmatpush1.bf16.msra.mxu0 0
    %2491 = vmatprep.subr.bf16.mxu0 0
    %2492 = vmatpush1.bf16.msra.mxu0 0
    %2493 = vmatprep.mubr.bf16.mxu0 0
    %2494 = vmatmul.mubr.bf16.gmra.mrb[0].mxu0 %v2389
    %v2495 = vpop.f32.mrb[0].mxu0
    %v2496 = vadd.f32 %v2411, %v2495
    %v2497 = vpop.f32.mrb[0].mxu0
    %v2498 = vpop.f32.mrb[0].mxu0
    %v2499 = vadd.f32 %v2411, %v2498
    %v2500 = vpop.f32.mrb[0].mxu0
    %2501 = vdwg.mxu0
    %v2502 = vmul.f32 %v2496, 0.5
    %v2503 = vmul.f32 %v2499, 0.5
    %v2504 = vmul.f32 %v2496, 0.70710677
    %v2505 = vmul.f32 %v2499, 0.70710677
    %v2506 = verf.f32.pop %v2504
    %v2507 = verf.f32.pop %v2505
    %v2508 = vadd.f32 %v2506, 1.0
    %v2509 = vadd.f32 %v2507, 1.0
    %v2510 = vmul.f32 %v2502, %v2508
    %v2511 = vmul.f32 %v2503, %v2509
    %v2512 = vpack.c.bf16 %v2511, %v2510
    %v2513 = vld [vmem:[%s9] sm:$0xf]
    %v2514 = vld [vmem:[%s9 + $0x4] sm:$0xf]
    %v2515 = vld [vmem:[%s9 + $0x8] sm:$0xf]
    %v2516 = vld [vmem:[%s9 + $0xc] sm:$0xf]
    %v2517 = vld [vmem:[%s9 + $0x10] sm:$0xf]
    %v2518 = vld [vmem:[%s9 + $0x14] sm:$0xf]
    %v2519 = vld [vmem:[%s9 + $0x18] sm:$0xf]
    %v2520 = vld [vmem:[%s9 + $0x1c] sm:$0xf]
    %v2521 = vld [vmem:[%s10] sm:$0x1]
    %v2523 = vlaneseq
    %v2524 = vshrl.u32 %v2523, 7
    %v2525 = vsub.s32 0, %v2524
    %v2526 = vrot.slane %v2521, %v2525
    %v2536 = vunpack.c.l.b16 %v2513
    %v2537 = vunpack.c.l.b16 %v2514
    %v2538 = vunpack.c.l.b16 %v2515
    %v2539 = vunpack.c.l.b16 %v2516
    %v2540 = vunpack.c.l.b16 %v2517
    %v2541 = vunpack.c.l.b16 %v2518
    %v2542 = vunpack.c.l.b16 %v2519
    %v2543 = vunpack.c.l.b16 %v2520
    %v2544 = vpack.c.b16 %v2537, %v2536
    %v2545 = vpack.c.b16 %v2539, %v2538
    %v2546 = vpack.c.b16 %v2541, %v2540
    %v2547 = vpack.c.b16 %v2543, %v2542
    %vm2552 = vcmask 523264
    %v2554 = vsel %vm2552, %v2512, 0
    %2556 = vmatprep.subr.bf16.mxu0 0
    %2557 = vmatpush1.bf16.msra.mxu0 %v2544
    %2558 = vmatprep.subr.bf16.mxu0 0
    %2559 = vmatpush1.bf16.msra.mxu0 %v2545
    %2560 = vmatprep.subr.bf16.mxu0 0
    %2561 = vmatpush1.bf16.msra.mxu0 %v2546
    %2562 = vmatprep.subr.bf16.mxu0 0
    %2563 = vmatpush1.bf16.msra.mxu0 %v2547
    %2564 = vmatprep.subr.bf16.mxu0 0
    %2565 = vmatpush1.bf16.msra.mxu0 0
    %2566 = vmatprep.subr.bf16.mxu0 0
    %2567 = vmatpush1.bf16.msra.mxu0 0
    %2568 = vmatprep.subr.bf16.mxu0 0
    %2569 = vmatpush1.bf16.msra.mxu0 0
    %2570 = vmatprep.subr.bf16.mxu0 0
    %2571 = vmatpush1.bf16.msra.mxu0 0
    %2572 = vmatprep.subr.bf16.mxu0 0
    %2573 = vmatpush1.bf16.msra.mxu0 0
    %2574 = vmatprep.subr.bf16.mxu0 0
    %2575 = vmatpush1.bf16.msra.mxu0 0
    %2576 = vmatprep.subr.bf16.mxu0 0
    %2577 = vmatpush1.bf16.msra.mxu0 0
    %2578 = vmatprep.subr.bf16.mxu0 0
    %2579 = vmatpush1.bf16.msra.mxu0 0
    %2580 = vmatprep.subr.bf16.mxu0 0
    %2581 = vmatpush1.bf16.msra.mxu0 0
    %2582 = vmatprep.subr.bf16.mxu0 0
    %2583 = vmatpush1.bf16.msra.mxu0 0
    %2584 = vmatprep.subr.bf16.mxu0 0
    %2585 = vmatpush1.bf16.msra.mxu0 0
    %2586 = vmatprep.subr.bf16.mxu0 0
    %2587 = vmatpush1.bf16.msra.mxu0 0
    %2588 = vmatprep.mubr.bf16.mxu0 0
    %2589 = vmatmul.mubr.bf16.gmra.mrb[0].mxu0 %v2554
    %v2590 = vpop.f32.mrb[0].mxu0
    %v2591 = vadd.f32 %v2526, %v2590
    %v2592 = vpop.f32.mrb[0].mxu0
    %v2593 = vpop.f32.mrb[0].mxu0
    %v2594 = vadd.f32 %v2526, %v2593
    %v2595 = vpop.f32.mrb[0].mxu0
    %2596 = vdwg.mxu0
    %v2597 = vmul.f32 %v2591, 0.5
    %v2598 = vmul.f32 %v2594, 0.5
    %v2599 = vmul.f32 %v2591, 0.70710677
    %v2600 = vmul.f32 %v2594, 0.70710677
    %v2601 = verf.f32.pop %v2599
    %v2602 = verf.f32.pop %v2600
    %v2603 = vadd.f32 %v2601, 1.0
    %v2604 = vadd.f32 %v2602, 1.0
    %v2605 = vmul.f32 %v2597, %v2603
    %v2606 = vmul.f32 %v2598, %v2604
    %v2607 = vpack.c.bf16 %v2606, %v2605
    %v2608 = vld [vmem:[%s11] sm:$0xf]
    %v2609 = vld [vmem:[%s11 + $0x4] sm:$0xf]
    %v2610 = vld [vmem:[%s11 + $0x8] sm:$0xf]
    %v2611 = vld [vmem:[%s11 + $0xc] sm:$0xf]
    %v2612 = vld [vmem:[#allocation2] sm:$0x1]
    %v2614 = vlaneseq
    %v2615 = vshrl.u32 %v2614, 7
    %v2616 = vsub.s32 0, %v2615
    %v2617 = vrot.slane %v2612, %v2616
    %v2623 = vunpack.c.l.b16 %v2608
    %v2624 = vunpack.c.l.b16 %v2609
    %v2625 = vunpack.c.l.b16 %v2610
    %v2626 = vunpack.c.l.b16 %v2611
    %v2627 = vpack.c.b16 %v2624, %v2623
    %v2628 = vpack.c.b16 %v2626, %v2625
    %vm2631 = vcmask 261120
    %v2633 = vsel %vm2631, %v2607, 0
    %2635 = vmatprep.subr.bf16.mxu0 0
    %2636 = vmatpush1.bf16.msra.mxu0 %v2627
    %2637 = vmatprep.subr.bf16.mxu0 0
    %2638 = vmatpush1.bf16.msra.mxu0 %v2628
    %2639 = vmatprep.subr.bf16.mxu0 0
    %2640 = vmatpush1.bf16.msra.mxu0 0
    %2641 = vmatprep.subr.bf16.mxu0 0
    %2642 = vmatpush1.bf16.msra.mxu0 0
    %2643 = vmatprep.subr.bf16.mxu0 0
    %2644 = vmatpush1.bf16.msra.mxu0 0
    %2645 = vmatprep.subr.bf16.mxu0 0
    %2646 = vmatpush1.bf16.msra.mxu0 0
    %2647 = vmatprep.subr.bf16.mxu0 0
    %2648 = vmatpush1.bf16.msra.mxu0 0
    %2649 = vmatprep.subr.bf16.mxu0 0
    %2650 = vmatpush1.bf16.msra.mxu0 0
    %2651 = vmatprep.subr.bf16.mxu0 0
    %2652 = vmatpush1.bf16.msra.mxu0 0
    %2653 = vmatprep.subr.bf16.mxu0 0
    %2654 = vmatpush1.bf16.msra.mxu0 0
    %2655 = vmatprep.subr.bf16.mxu0 0
    %2656 = vmatpush1.bf16.msra.mxu0 0
    %2657 = vmatprep.subr.bf16.mxu0 0
    %2658 = vmatpush1.bf16.msra.mxu0 0
    %2659 = vmatprep.subr.bf16.mxu0 0
    %2660 = vmatpush1.bf16.msra.mxu0 0
    %2661 = vmatprep.subr.bf16.mxu0 0
    %2662 = vmatpush1.bf16.msra.mxu0 0
    %2663 = vmatprep.subr.bf16.mxu0 0
    %2664 = vmatpush1.bf16.msra.mxu0 0
    %2665 = vmatprep.subr.bf16.mxu0 0
    %2666 = vmatpush1.bf16.msra.mxu0 0
    %2667 = vmatprep.mubr.bf16.mxu0 0
    %2668 = vmatmul.mubr.bf16.gmra.mrb[0].mxu0 %v2633
    %v2669 = vpop.f32.mrb[0].mxu0
    %v2670 = vadd.f32 %v2617, %v2669
    %v2671 = vpop.f32.mrb[0].mxu0
    %v2672 = vpop.f32.mrb[0].mxu0
    %v2673 = vadd.f32 %v2617, %v2672
    %v2674 = vpop.f32.mrb[0].mxu0
    %2675 = vdwg.mxu0
    %v2676 = vmul.f32 %v2670, 0.5
    %v2677 = vmul.f32 %v2673, 0.5
    %v2678 = vtanh.pop %v2676
    %v2679 = vtanh.pop %v2677
    %v2680 = vadd.f32 %v2678, 1.0
    %v2681 = vadd.f32 %v2679, 1.0
    %v2682 = vmul.f32 %v2680, 0.5
    %v2683 = vmul.f32 %v2681, 0.5
    %vm2684 = vcmask 7168
    %2685 = vst.msk [vmem:[%s13] sm:$0xff] %vm2684, %v2682
    %2686 = vst.msk [vmem:[%s13 + $0x8] sm:$0xff] %vm2684, %v2683
    // Predicated region
    $region66: #{tpu_custom_call.1} parent=1 // pred_check
      _
    $region67: #{tpu_custom_call.1} parent=1 // pred_check_branch
      %2688 = sbr.rel (0) target = $region69
    $region68: #{tpu_custom_call.1} parent=1 // pred_region
      _
    $region69: #{tpu_custom_call.1} parent=1 // pred_fallthru
      _
    // Predicated region
    $region70: #{tpu_custom_call.1} parent=1 // pred_check
      _
    $region71: #{tpu_custom_call.1} parent=1 // pred_check_branch
      %2690 = sbr.rel (0) target = $region73
    $region72: #{tpu_custom_call.1} parent=1 // pred_region
      _
    $region73: #{tpu_custom_call.1} parent=1 // pred_fallthru
      _
    %2691 = vsyncpa [#allocation4], 1
    %2692 = vsyncpa [#allocation6], 1

</llo_original>
